<compile_context>
chip_gen: v7x
topology: tpu7x:2x2x1
jax: 0.10.0
libtpu: 0.0.40
codegen_flags: <defaults>
</compile_context>

<pallas_src>
import jax
import jax.numpy as jnp
import numpy as np
from jax import lax
from jax.experimental import pallas as pl
from jax.experimental.pallas import tpu as pltpu

NEG_SLOPE = 0.01   # nn.LeakyReLU default
BN_EPS = 1e-5      # nn.BatchNorm2d default


def _leaky(x):
    return jnp.where(x >= 0, x, NEG_SLOPE * x)


# ----------------------------- fused ColorDown kernel -----------------------------
def make_colordown_kernel(N, H, W, Cin, Cout):
    Ho, Wo = H // 2, W // 2          # conv2 output extent
    Wh = W // 2                      # half-width of a column-parity plane of conv1 output
    Whp = (W + 2) // 2               # half-width of the padded planes

    def kernel(x_ref, w1_ref, b1_ref, w2_ref, b2_ref, g_ref, be_ref, o_ref):
        n = pl.program_id(0)

        # padded input, pre-split by column parity in the wrapper:
        #   x_ref[0, s, h, q, c] == xpad[h, 2q + s, c]
        xplanes = (x_ref[0, 0], x_ref[0, 1])           # each (H+2, Whp, Cin)

        # ---- conv1 3x3 s1 p1 + LeakyReLU, computed per output-column parity so the
        #      later stride-2 conv needs no strided access. One K=9*Cin matmul each.
        y1 = []
        for b in range(2):
            taps = []
            for ky in range(3):
                for kx in range(3):
                    sp, off = (b + kx) % 2, (b + kx) // 2
                    taps.append(xplanes[sp][ky:ky + H, off:off + Wh, :])   # (H, Wh, Cin)
            patch1 = jnp.concatenate(taps, axis=-1).reshape(H * Wh, 9 * Cin)
            yb = _leaky(jnp.dot(patch1, w1_ref[...],
                                preferred_element_type=jnp.float32) + b1_ref[...])
            y1.append(yb.reshape(H, Wh, Cout))         # y1[b][y, v, :] = conv1[y, 2v+b, :]

        # ---- zero-padded (p=1) conv1 output, kept as column-parity planes in VMEM:
        #      even y1pad columns = [0, odd conv1 cols], odd y1pad cols = [even cols, 0]
        zc = jnp.zeros((H, 1, Cout), jnp.float32)
        zr = jnp.zeros((1, Whp, Cout), jnp.float32)
        ecol = jnp.concatenate([zc, y1[1]], axis=1)    # (H, Whp, C)
        ocol = jnp.concatenate([y1[0], zc], axis=1)    # (H, Whp, C)
        planes = []
        for pln in (ecol, ocol):
            pln = jnp.concatenate([zr, pln, zr], axis=0)          # (H+2, Whp, C)
            planes.append(pln.reshape(Ho + 1, 2, Whp, Cout))      # rows split by parity

        # ---- conv2 4x4 s2 p1 + LeakyReLU: all 16 taps folded into one K=16*C matmul.
        #      planes[b][u, a, q, :] == y1pad[2u + a, 2q + b, :]
        slabs = []
        for dy in range(4):
            qy, a = dy // 2, dy % 2
            for dx in range(4):
                qx, b = dx // 2, dx % 2
                slabs.append(planes[b][qy:qy + Ho, a, qx:qx + Wo, :])      # (Ho, Wo, C)
        patch2 = jnp.concatenate(slabs, axis=-1).reshape(Ho * Wo, 16 * Cout)
        y2 = _leaky(jnp.dot(patch2, w2_ref[...],
                            preferred_element_type=jnp.float32) + b2_ref[...])

        # resident output block (constant index map) -> stays in VMEM for the whole grid
        o_ref[pl.ds(n, 1)] = y2.reshape(1, Ho * Wo, Cout)

        # ---- last batch step: BatchNorm (training mode, batch stats) applied in place
        #      on the VMEM-resident output; no extra pass over HBM.
        @pl.when(n == pl.num_programs(0) - 1)
        def _():
            y = o_ref[...]                                        # (N, Ho*Wo, C)
            cnt = float(N * Ho * Wo)
            mean = jnp.sum(jnp.sum(y, axis=0, keepdims=True),
                           axis=1, keepdims=True) / cnt           # (1, 1, C)
            d = y - mean
            var = jnp.sum(jnp.sum(d * d, axis=0, keepdims=True),
                          axis=1, keepdims=True) / cnt            # biased, like torch BN
            inv = lax.rsqrt(var + BN_EPS)
            o_ref[...] = (d * inv * g_ref[...].reshape(1, 1, Cout)
                          + be_ref[...].reshape(1, 1, Cout))

    return kernel


# ------------------------------------ wrapper ------------------------------------
def color_down(x_nchw, params):
    w1, b1, w2, b2, gamma, beta = params              # torch-shaped parameters
    N, Cin, H, W = x_nchw.shape
    Cout = w1.shape[0]
    Ho, Wo = H // 2, W // 2
    Hp, Whp = H + 2, (W + 2) // 2

    # NCHW -> NHWC, pad by 1, and split the padded input by W-column parity.
    # (Only wrapper-side layout op left; it touches just the tiny network input.)
    x = jnp.transpose(x_nchw, (0, 2, 3, 1)).astype(jnp.float32)
    xpad = jnp.pad(x, ((0, 0), (1, 1), (1, 1), (0, 0)))           # (N, H+2, W+2, Cin)
    xps = (xpad.reshape(N, Hp, Whp, 2, Cin)
               .transpose(0, 3, 1, 2, 4))                          # (N, 2, H+2, Whp, Cin)

    # pre-packed 2-D weights (single dense tiles, row order matches in-kernel im2col)
    w1p = jnp.transpose(w1, (2, 3, 1, 0)).reshape(9 * Cin, Cout).astype(jnp.float32)
    w2p = jnp.transpose(w2, (2, 3, 1, 0)).reshape(16 * Cout, Cout).astype(jnp.float32)
    b1p = b1.reshape(1, Cout).astype(jnp.float32)
    b2p = b2.reshape(1, Cout).astype(jnp.float32)
    gp = gamma.reshape(1, Cout).astype(jnp.float32)
    bp = beta.reshape(1, Cout).astype(jnp.float32)

    y = pl.pallas_call(
        make_colordown_kernel(N, H, W, Cin, Cout),
        out_shape=jax.ShapeDtypeStruct((N, Ho * Wo, Cout), jnp.float32),
        grid=(N,),
        in_specs=[
            pl.BlockSpec((1, 2, Hp, Whp, Cin), lambda n: (n, 0, 0, 0, 0)),
            pl.BlockSpec((9 * Cin, Cout), lambda n: (0, 0)),
            pl.BlockSpec((1, Cout), lambda n: (0, 0)),
            pl.BlockSpec((16 * Cout, Cout), lambda n: (0, 0)),
            pl.BlockSpec((1, Cout), lambda n: (0, 0)),
            pl.BlockSpec((1, Cout), lambda n: (0, 0)),
            pl.BlockSpec((1, Cout), lambda n: (0, 0)),
        ],
        # resident output (accumulator-style) so the final-step BN can touch all batches;
        # this requires the batch grid axis to be sequential ("arbitrary").
        out_specs=pl.BlockSpec((N, Ho * Wo, Cout), lambda n: (0, 0, 0)),
        compiler_params=pltpu.CompilerParams(dimension_semantics=("arbitrary",)),
    )(xps, w1p, b1p, w2p, b2p, gp, bp)

    return jnp.transpose(y.reshape(N, Ho, Wo, Cout), (0, 3, 1, 2))    # back to NCHW


# --------------------------- reference (plain JAX / XLA) ---------------------------
def reference(x, w1, b1, w2, b2, gamma, beta):
    dn = ("NCHW", "OIHW", "NCHW")
    y = lax.conv_general_dilated(x, w1, (1, 1), ((1, 1), (1, 1)), dimension_numbers=dn)
    y = _leaky(y + b1.reshape(1, -1, 1, 1))
    y = lax.conv_general_dilated(y, w2, (2, 2), ((1, 1), (1, 1)), dimension_numbers=dn)
    y = _leaky(y + b2.reshape(1, -1, 1, 1))
    mean = jnp.mean(y, axis=(0, 2, 3), keepdims=True)
    var = jnp.mean((y - mean) ** 2, axis=(0, 2, 3), keepdims=True)     # biased, like torch BN
    return ((y - mean) * lax.rsqrt(var + BN_EPS) * gamma.reshape(1, -1, 1, 1)
            + beta.reshape(1, -1, 1, 1))


if __name__ == "__main__":
    N, in_ch, out_ch, H, W = 2, 4, 8, 16, 16

    key = jax.random.PRNGKey(0)
    k1, k2, k3, k4, kx = jax.random.split(key, 5)
    # deterministic synthetic parameters (shapes per the module's __init__)
    w1 = 0.1 * jax.random.normal(k1, (out_ch, in_ch, 3, 3), jnp.float32)
    b1 = 0.1 * jax.random.normal(k2, (out_ch,), jnp.float32)
    w2 = 0.1 * jax.random.normal(k3, (out_ch, out_ch, 4, 4), jnp.float32)
    b2 = 0.1 * jax.random.normal(k4, (out_ch,), jnp.float32)
    gamma = jnp.ones((out_ch,), jnp.float32)   # BatchNorm2d default init
    beta = jnp.zeros((out_ch,), jnp.float32)
    params = (w1, b1, w2, b2, gamma, beta)

    x = jax.random.normal(kx, (N, in_ch, H, W), jnp.float32)

    out = color_down(x, params)
    out = jax.block_until_ready(out)

    ref = jax.block_until_ready(reference(x, *params))
    assert out.shape == (N, out_ch, H // 2, W // 2), out.shape
    np.testing.assert_allclose(np.asarray(out), np.asarray(ref), atol=5e-2, rtol=5e-2)

    print("KERNEL_OK")
</pallas_src>

<mosaic_0001>
module attributes {stable_mosaic.version = 11 : i64} {
  func.func @kernel(%arg0: i32, %arg1: memref<1x2x18x9x4xf32, #tpu.memory_space<vmem>>, %arg2: memref<36x8xf32, #tpu.memory_space<vmem>>, %arg3: memref<1x8xf32, #tpu.memory_space<vmem>>, %arg4: memref<128x8xf32, #tpu.memory_space<vmem>>, %arg5: memref<1x8xf32, #tpu.memory_space<vmem>>, %arg6: memref<1x8xf32, #tpu.memory_space<vmem>>, %arg7: memref<1x8xf32, #tpu.memory_space<vmem>>, %arg8: memref<2x64x8xf32, #tpu.memory_space<vmem>>) attributes {dimension_semantics = [#tpu.dimension_semantics<arbitrary>], iteration_bounds = array<i64: 2>, scalar_prefetch = 0 : i64, scratch_operands = 0 : i64, tpu.core_type = #tpu.core_type<tc>, window_params = [{transform_indices = @transform_0, window_bounds = array<i64: 1, 2, 18, 9, 4>}, {pipeline_mode = #tpu.pipeline_mode<synchronous>, transform_indices = @transform_1, window_bounds = array<i64: 36, 8>}, {pipeline_mode = #tpu.pipeline_mode<synchronous>, transform_indices = @transform_2, window_bounds = array<i64: 1, 8>}, {pipeline_mode = #tpu.pipeline_mode<synchronous>, transform_indices = @transform_3, window_bounds = array<i64: 128, 8>}, {pipeline_mode = #tpu.pipeline_mode<synchronous>, transform_indices = @transform_4, window_bounds = array<i64: 1, 8>}, {pipeline_mode = #tpu.pipeline_mode<synchronous>, transform_indices = @transform_5, window_bounds = array<i64: 1, 8>}, {pipeline_mode = #tpu.pipeline_mode<synchronous>, transform_indices = @transform_6, window_bounds = array<i64: 1, 8>}, {pipeline_mode = #tpu.pipeline_mode<synchronous>, transform_indices = @transform_7, window_bounds = array<i64: 2, 64, 8>}]} {
    %c0 = arith.constant 0 : index
    %c0_0 = arith.constant 0 : index
    %c0_1 = arith.constant 0 : index
    %c0_2 = arith.constant 0 : index
    %c0_3 = arith.constant 0 : index
    %0 = vector.load %arg1[%c0, %c0_0, %c0_1, %c0_2, %c0_3] : memref<1x2x18x9x4xf32, #tpu.memory_space<vmem>>, vector<1x1x18x9x4xf32>
    %1 = vector.shape_cast %0 : vector<1x1x18x9x4xf32> to vector<18x9x4xf32>
    %c0_4 = arith.constant 0 : index
    %c1 = arith.constant 1 : index
    %c0_5 = arith.constant 0 : index
    %c0_6 = arith.constant 0 : index
    %c0_7 = arith.constant 0 : index
    %2 = vector.load %arg1[%c0_4, %c1, %c0_5, %c0_6, %c0_7] : memref<1x2x18x9x4xf32, #tpu.memory_space<vmem>>, vector<1x1x18x9x4xf32>
    %3 = vector.shape_cast %2 : vector<1x1x18x9x4xf32> to vector<18x9x4xf32>
    %4 = vector.extract_strided_slice %1 {offsets = [0, 0, 0], sizes = [16, 8, 4], strides = [1, 1, 1]} : vector<18x9x4xf32> to vector<16x8x4xf32>
    %5 = vector.extract_strided_slice %3 {offsets = [0, 0, 0], sizes = [16, 8, 4], strides = [1, 1, 1]} : vector<18x9x4xf32> to vector<16x8x4xf32>
    %6 = vector.extract_strided_slice %1 {offsets = [0, 1, 0], sizes = [16, 8, 4], strides = [1, 1, 1]} : vector<18x9x4xf32> to vector<16x8x4xf32>
    %7 = vector.extract_strided_slice %1 {offsets = [1, 0, 0], sizes = [16, 8, 4], strides = [1, 1, 1]} : vector<18x9x4xf32> to vector<16x8x4xf32>
    %8 = vector.extract_strided_slice %3 {offsets = [1, 0, 0], sizes = [16, 8, 4], strides = [1, 1, 1]} : vector<18x9x4xf32> to vector<16x8x4xf32>
    %9 = vector.extract_strided_slice %1 {offsets = [1, 1, 0], sizes = [16, 8, 4], strides = [1, 1, 1]} : vector<18x9x4xf32> to vector<16x8x4xf32>
    %10 = vector.extract_strided_slice %1 {offsets = [2, 0, 0], sizes = [16, 8, 4], strides = [1, 1, 1]} : vector<18x9x4xf32> to vector<16x8x4xf32>
    %11 = vector.extract_strided_slice %3 {offsets = [2, 0, 0], sizes = [16, 8, 4], strides = [1, 1, 1]} : vector<18x9x4xf32> to vector<16x8x4xf32>
    %12 = vector.extract_strided_slice %1 {offsets = [2, 1, 0], sizes = [16, 8, 4], strides = [1, 1, 1]} : vector<18x9x4xf32> to vector<16x8x4xf32>
    %13 = tpu.concatenate %4, %5, %6, %7, %8, %9, %10, %11, %12 in 2 : vector<16x8x4xf32>, vector<16x8x4xf32>, vector<16x8x4xf32>, vector<16x8x4xf32>, vector<16x8x4xf32>, vector<16x8x4xf32>, vector<16x8x4xf32>, vector<16x8x4xf32>, vector<16x8x4xf32> -> vector<16x8x36xf32>
    %14 = vector.shape_cast %13 : vector<16x8x36xf32> to vector<128x36xf32>
    %c0_8 = arith.constant 0 : index
    %c0_9 = arith.constant 0 : index
    %15 = vector.load %arg2[%c0_8, %c0_9] : memref<36x8xf32, #tpu.memory_space<vmem>>, vector<36x8xf32>
    %cst = arith.constant dense<0.000000e+00> : vector<128x8xf32>
    %16 = tpu.matmul %14, %15, %cst {dimension_numbers = #tpu.dot_dimension_numbers<[1], [0], [0], [1], [0, 0, 1, 1], [], []>} : vector<128x36xf32>, vector<36x8xf32>, vector<128x8xf32> -> vector<128x8xf32>
    %c0_10 = arith.constant 0 : index
    %c0_11 = arith.constant 0 : index
    %17 = vector.load %arg3[%c0_10, %c0_11] : memref<1x8xf32, #tpu.memory_space<vmem>>, vector<1x8xf32>
    %18 = vector.broadcast %17 : vector<1x8xf32> to vector<128x8xf32>
    %19 = arith.addf %16, %18 : vector<128x8xf32>
    %cst_12 = arith.constant 0.000000e+00 : f32
    %20 = vector.broadcast %cst_12 : f32 to vector<128x8xf32>
    %21 = arith.cmpf oge, %19, %20 : vector<128x8xf32>
    %cst_13 = arith.constant 0.00999999977 : f32
    %22 = vector.broadcast %cst_13 : f32 to vector<128x8xf32>
    %23 = arith.mulf %22, %19 : vector<128x8xf32>
    %24 = arith.select %21, %19, %23 : vector<128x8xi1>, vector<128x8xf32>
    %25 = vector.shape_cast %24 : vector<128x8xf32> to vector<16x8x8xf32>
    %26 = vector.extract_strided_slice %3 {offsets = [0, 0, 0], sizes = [16, 8, 4], strides = [1, 1, 1]} : vector<18x9x4xf32> to vector<16x8x4xf32>
    %27 = vector.extract_strided_slice %1 {offsets = [0, 1, 0], sizes = [16, 8, 4], strides = [1, 1, 1]} : vector<18x9x4xf32> to vector<16x8x4xf32>
    %28 = vector.extract_strided_slice %3 {offsets = [0, 1, 0], sizes = [16, 8, 4], strides = [1, 1, 1]} : vector<18x9x4xf32> to vector<16x8x4xf32>
    %29 = vector.extract_strided_slice %3 {offsets = [1, 0, 0], sizes = [16, 8, 4], strides = [1, 1, 1]} : vector<18x9x4xf32> to vector<16x8x4xf32>
    %30 = vector.extract_strided_slice %1 {offsets = [1, 1, 0], sizes = [16, 8, 4], strides = [1, 1, 1]} : vector<18x9x4xf32> to vector<16x8x4xf32>
    %31 = vector.extract_strided_slice %3 {offsets = [1, 1, 0], sizes = [16, 8, 4], strides = [1, 1, 1]} : vector<18x9x4xf32> to vector<16x8x4xf32>
    %32 = vector.extract_strided_slice %3 {offsets = [2, 0, 0], sizes = [16, 8, 4], strides = [1, 1, 1]} : vector<18x9x4xf32> to vector<16x8x4xf32>
    %33 = vector.extract_strided_slice %1 {offsets = [2, 1, 0], sizes = [16, 8, 4], strides = [1, 1, 1]} : vector<18x9x4xf32> to vector<16x8x4xf32>
    %34 = vector.extract_strided_slice %3 {offsets = [2, 1, 0], sizes = [16, 8, 4], strides = [1, 1, 1]} : vector<18x9x4xf32> to vector<16x8x4xf32>
    %35 = tpu.concatenate %26, %27, %28, %29, %30, %31, %32, %33, %34 in 2 : vector<16x8x4xf32>, vector<16x8x4xf32>, vector<16x8x4xf32>, vector<16x8x4xf32>, vector<16x8x4xf32>, vector<16x8x4xf32>, vector<16x8x4xf32>, vector<16x8x4xf32>, vector<16x8x4xf32> -> vector<16x8x36xf32>
    %36 = vector.shape_cast %35 : vector<16x8x36xf32> to vector<128x36xf32>
    %c0_14 = arith.constant 0 : index
    %c0_15 = arith.constant 0 : index
    %37 = vector.load %arg2[%c0_14, %c0_15] : memref<36x8xf32, #tpu.memory_space<vmem>>, vector<36x8xf32>
    %cst_16 = arith.constant dense<0.000000e+00> : vector<128x8xf32>
    %38 = tpu.matmul %36, %37, %cst_16 {dimension_numbers = #tpu.dot_dimension_numbers<[1], [0], [0], [1], [0, 0, 1, 1], [], []>} : vector<128x36xf32>, vector<36x8xf32>, vector<128x8xf32> -> vector<128x8xf32>
    %c0_17 = arith.constant 0 : index
    %c0_18 = arith.constant 0 : index
    %39 = vector.load %arg3[%c0_17, %c0_18] : memref<1x8xf32, #tpu.memory_space<vmem>>, vector<1x8xf32>
    %40 = vector.broadcast %39 : vector<1x8xf32> to vector<128x8xf32>
    %41 = arith.addf %38, %40 : vector<128x8xf32>
    %cst_19 = arith.constant 0.000000e+00 : f32
    %42 = vector.broadcast %cst_19 : f32 to vector<128x8xf32>
    %43 = arith.cmpf oge, %41, %42 : vector<128x8xf32>
    %cst_20 = arith.constant 0.00999999977 : f32
    %44 = vector.broadcast %cst_20 : f32 to vector<128x8xf32>
    %45 = arith.mulf %44, %41 : vector<128x8xf32>
    %46 = arith.select %43, %41, %45 : vector<128x8xi1>, vector<128x8xf32>
    %47 = vector.shape_cast %46 : vector<128x8xf32> to vector<16x8x8xf32>
    %cst_21 = arith.constant 0.000000e+00 : f32
    %48 = vector.broadcast %cst_21 : f32 to vector<16x1x8xf32>
    %cst_22 = arith.constant 0.000000e+00 : f32
    %49 = vector.broadcast %cst_22 : f32 to vector<1x9x8xf32>
    %50 = tpu.concatenate %48, %47 in 1 : vector<16x1x8xf32>, vector<16x8x8xf32> -> vector<16x9x8xf32>
    %51 = tpu.concatenate %25, %48 in 1 : vector<16x8x8xf32>, vector<16x1x8xf32> -> vector<16x9x8xf32>
    %52 = tpu.concatenate %49, %50, %49 in 0 : vector<1x9x8xf32>, vector<16x9x8xf32>, vector<1x9x8xf32> -> vector<18x9x8xf32>
    %53 = vector.shape_cast %52 : vector<18x9x8xf32> to vector<9x2x9x8xf32>
    %54 = tpu.concatenate %49, %51, %49 in 0 : vector<1x9x8xf32>, vector<16x9x8xf32>, vector<1x9x8xf32> -> vector<18x9x8xf32>
    %55 = vector.shape_cast %54 : vector<18x9x8xf32> to vector<9x2x9x8xf32>
    %56 = vector.extract_strided_slice %53 {offsets = [0, 0, 0, 0], sizes = [8, 1, 8, 8], strides = [1, 1, 1, 1]} : vector<9x2x9x8xf32> to vector<8x1x8x8xf32>
    %57 = vector.shape_cast %56 : vector<8x1x8x8xf32> to vector<8x8x8xf32>
    %58 = vector.extract_strided_slice %55 {offsets = [0, 0, 0, 0], sizes = [8, 1, 8, 8], strides = [1, 1, 1, 1]} : vector<9x2x9x8xf32> to vector<8x1x8x8xf32>
    %59 = vector.shape_cast %58 : vector<8x1x8x8xf32> to vector<8x8x8xf32>
    %60 = vector.extract_strided_slice %53 {offsets = [0, 0, 1, 0], sizes = [8, 1, 8, 8], strides = [1, 1, 1, 1]} : vector<9x2x9x8xf32> to vector<8x1x8x8xf32>
    %61 = vector.shape_cast %60 : vector<8x1x8x8xf32> to vector<8x8x8xf32>
    %62 = vector.extract_strided_slice %55 {offsets = [0, 0, 1, 0], sizes = [8, 1, 8, 8], strides = [1, 1, 1, 1]} : vector<9x2x9x8xf32> to vector<8x1x8x8xf32>
    %63 = vector.shape_cast %62 : vector<8x1x8x8xf32> to vector<8x8x8xf32>
    %64 = vector.extract_strided_slice %53 {offsets = [0, 1, 0, 0], sizes = [8, 1, 8, 8], strides = [1, 1, 1, 1]} : vector<9x2x9x8xf32> to vector<8x1x8x8xf32>
    %65 = vector.shape_cast %64 : vector<8x1x8x8xf32> to vector<8x8x8xf32>
    %66 = vector.extract_strided_slice %55 {offsets = [0, 1, 0, 0], sizes = [8, 1, 8, 8], strides = [1, 1, 1, 1]} : vector<9x2x9x8xf32> to vector<8x1x8x8xf32>
    %67 = vector.shape_cast %66 : vector<8x1x8x8xf32> to vector<8x8x8xf32>
    %68 = vector.extract_strided_slice %53 {offsets = [0, 1, 1, 0], sizes = [8, 1, 8, 8], strides = [1, 1, 1, 1]} : vector<9x2x9x8xf32> to vector<8x1x8x8xf32>
    %69 = vector.shape_cast %68 : vector<8x1x8x8xf32> to vector<8x8x8xf32>
    %70 = vector.extract_strided_slice %55 {offsets = [0, 1, 1, 0], sizes = [8, 1, 8, 8], strides = [1, 1, 1, 1]} : vector<9x2x9x8xf32> to vector<8x1x8x8xf32>
    %71 = vector.shape_cast %70 : vector<8x1x8x8xf32> to vector<8x8x8xf32>
    %72 = vector.extract_strided_slice %53 {offsets = [1, 0, 0, 0], sizes = [8, 1, 8, 8], strides = [1, 1, 1, 1]} : vector<9x2x9x8xf32> to vector<8x1x8x8xf32>
    %73 = vector.shape_cast %72 : vector<8x1x8x8xf32> to vector<8x8x8xf32>
    %74 = vector.extract_strided_slice %55 {offsets = [1, 0, 0, 0], sizes = [8, 1, 8, 8], strides = [1, 1, 1, 1]} : vector<9x2x9x8xf32> to vector<8x1x8x8xf32>
    %75 = vector.shape_cast %74 : vector<8x1x8x8xf32> to vector<8x8x8xf32>
    %76 = vector.extract_strided_slice %53 {offsets = [1, 0, 1, 0], sizes = [8, 1, 8, 8], strides = [1, 1, 1, 1]} : vector<9x2x9x8xf32> to vector<8x1x8x8xf32>
    %77 = vector.shape_cast %76 : vector<8x1x8x8xf32> to vector<8x8x8xf32>
    %78 = vector.extract_strided_slice %55 {offsets = [1, 0, 1, 0], sizes = [8, 1, 8, 8], strides = [1, 1, 1, 1]} : vector<9x2x9x8xf32> to vector<8x1x8x8xf32>
    %79 = vector.shape_cast %78 : vector<8x1x8x8xf32> to vector<8x8x8xf32>
    %80 = vector.extract_strided_slice %53 {offsets = [1, 1, 0, 0], sizes = [8, 1, 8, 8], strides = [1, 1, 1, 1]} : vector<9x2x9x8xf32> to vector<8x1x8x8xf32>
    %81 = vector.shape_cast %80 : vector<8x1x8x8xf32> to vector<8x8x8xf32>
    %82 = vector.extract_strided_slice %55 {offsets = [1, 1, 0, 0], sizes = [8, 1, 8, 8], strides = [1, 1, 1, 1]} : vector<9x2x9x8xf32> to vector<8x1x8x8xf32>
    %83 = vector.shape_cast %82 : vector<8x1x8x8xf32> to vector<8x8x8xf32>
    %84 = vector.extract_strided_slice %53 {offsets = [1, 1, 1, 0], sizes = [8, 1, 8, 8], strides = [1, 1, 1, 1]} : vector<9x2x9x8xf32> to vector<8x1x8x8xf32>
    %85 = vector.shape_cast %84 : vector<8x1x8x8xf32> to vector<8x8x8xf32>
    %86 = vector.extract_strided_slice %55 {offsets = [1, 1, 1, 0], sizes = [8, 1, 8, 8], strides = [1, 1, 1, 1]} : vector<9x2x9x8xf32> to vector<8x1x8x8xf32>
    %87 = vector.shape_cast %86 : vector<8x1x8x8xf32> to vector<8x8x8xf32>
    %88 = tpu.concatenate %57, %59, %61, %63, %65, %67, %69, %71, %73, %75, %77, %79, %81, %83, %85, %87 in 2 : vector<8x8x8xf32>, vector<8x8x8xf32>, vector<8x8x8xf32>, vector<8x8x8xf32>, vector<8x8x8xf32>, vector<8x8x8xf32>, vector<8x8x8xf32>, vector<8x8x8xf32>, vector<8x8x8xf32>, vector<8x8x8xf32>, vector<8x8x8xf32>, vector<8x8x8xf32>, vector<8x8x8xf32>, vector<8x8x8xf32>, vector<8x8x8xf32>, vector<8x8x8xf32> -> vector<8x8x128xf32>
    %89 = vector.shape_cast %88 : vector<8x8x128xf32> to vector<64x128xf32>
    %c0_23 = arith.constant 0 : index
    %c0_24 = arith.constant 0 : index
    %90 = vector.load %arg4[%c0_23, %c0_24] : memref<128x8xf32, #tpu.memory_space<vmem>>, vector<128x8xf32>
    %cst_25 = arith.constant dense<0.000000e+00> : vector<64x8xf32>
    %91 = tpu.matmul %89, %90, %cst_25 {dimension_numbers = #tpu.dot_dimension_numbers<[1], [0], [0], [1], [0, 0, 1, 1], [], []>} : vector<64x128xf32>, vector<128x8xf32>, vector<64x8xf32> -> vector<64x8xf32>
    %c0_26 = arith.constant 0 : index
    %c0_27 = arith.constant 0 : index
    %92 = vector.load %arg5[%c0_26, %c0_27] : memref<1x8xf32, #tpu.memory_space<vmem>>, vector<1x8xf32>
    %93 = vector.broadcast %92 : vector<1x8xf32> to vector<64x8xf32>
    %94 = arith.addf %91, %93 : vector<64x8xf32>
    %cst_28 = arith.constant 0.000000e+00 : f32
    %95 = vector.broadcast %cst_28 : f32 to vector<64x8xf32>
    %96 = arith.cmpf oge, %94, %95 : vector<64x8xf32>
    %cst_29 = arith.constant 0.00999999977 : f32
    %97 = vector.broadcast %cst_29 : f32 to vector<64x8xf32>
    %98 = arith.mulf %97, %94 : vector<64x8xf32>
    %99 = arith.select %96, %94, %98 : vector<64x8xi1>, vector<64x8xf32>
    %100 = vector.shape_cast %99 : vector<64x8xf32> to vector<1x64x8xf32>
    %101 = arith.index_cast %arg0 : i32 to index
    %c0_30 = arith.constant 0 : index
    %c0_31 = arith.constant 0 : index
    %102 = vector.load %arg8[%101, %c0_30, %c0_31] : memref<2x64x8xf32, #tpu.memory_space<vmem>>, vector<1x64x8xf32>
    tpu.vector_store %arg8[%101, %c0_30, %c0_31], %100 {strides = array<i32>} : memref<2x64x8xf32, #tpu.memory_space<vmem>>, vector<1x64x8xf32>,
    %c1_i32 = arith.constant 1 : i32
    %103 = arith.cmpi eq, %arg0, %c1_i32 : i32
    %104 = arith.extui %103 : i1 to i32
    %c0_i32 = arith.constant 0 : i32
    %105 = arith.cmpi ne, %104, %c0_i32 : i32
    scf.if %105 {
      %c0_32 = arith.constant 0 : index
      %c0_33 = arith.constant 0 : index
      %c0_34 = arith.constant 0 : index
      %106 = vector.load %arg8[%c0_32, %c0_33, %c0_34] : memref<2x64x8xf32, #tpu.memory_space<vmem>>, vector<2x64x8xf32>
      %cst_35 = arith.constant dense<0.000000e+00> : vector<64x8xf32>
      %107 = vector.multi_reduction <add>, %106, %cst_35 [0] : vector<2x64x8xf32> to vector<64x8xf32>
      %108 = vector.shape_cast %107 : vector<64x8xf32> to vector<1x64x8xf32>
      %cst_36 = arith.constant dense<0.000000e+00> : vector<1x8xf32>
      %109 = vector.multi_reduction <add>, %108, %cst_36 [1] : vector<1x64x8xf32> to vector<1x8xf32>
      %110 = vector.shape_cast %109 : vector<1x8xf32> to vector<1x1x8xf32>
      %cst_37 = arith.constant 1.280000e+02 : f32
      %111 = vector.broadcast %cst_37 : f32 to vector<1x1x8xf32>
      %112 = arith.divf %110, %111 : vector<1x1x8xf32>
      %113 = vector.broadcast %112 : vector<1x1x8xf32> to vector<2x64x8xf32>
      %114 = arith.subf %106, %113 : vector<2x64x8xf32>
      %115 = arith.mulf %114, %114 : vector<2x64x8xf32>
      %cst_38 = arith.constant dense<0.000000e+00> : vector<64x8xf32>
      %116 = vector.multi_reduction <add>, %115, %cst_38 [0] : vector<2x64x8xf32> to vector<64x8xf32>
      %117 = vector.shape_cast %116 : vector<64x8xf32> to vector<1x64x8xf32>
      %cst_39 = arith.constant dense<0.000000e+00> : vector<1x8xf32>
      %118 = vector.multi_reduction <add>, %117, %cst_39 [1] : vector<1x64x8xf32> to vector<1x8xf32>
      %119 = vector.shape_cast %118 : vector<1x8xf32> to vector<1x1x8xf32>
      %cst_40 = arith.constant 1.280000e+02 : f32
      %120 = vector.broadcast %cst_40 : f32 to vector<1x1x8xf32>
      %121 = arith.divf %119, %120 : vector<1x1x8xf32>
      %cst_41 = arith.constant 9.99999974E-6 : f32
      %122 = vector.broadcast %cst_41 : f32 to vector<1x1x8xf32>
      %123 = arith.addf %121, %122 : vector<1x1x8xf32>
      %124 = math.rsqrt %123 : vector<1x1x8xf32>
      %125 = vector.broadcast %124 : vector<1x1x8xf32> to vector<2x64x8xf32>
      %126 = arith.mulf %114, %125 : vector<2x64x8xf32>
      %c0_42 = arith.constant 0 : index
      %c0_43 = arith.constant 0 : index
      %127 = vector.load %arg6[%c0_42, %c0_43] : memref<1x8xf32, #tpu.memory_space<vmem>>, vector<1x8xf32>
      %128 = vector.shape_cast %127 : vector<1x8xf32> to vector<1x1x8xf32>
      %129 = vector.broadcast %128 : vector<1x1x8xf32> to vector<2x64x8xf32>
      %130 = arith.mulf %126, %129 : vector<2x64x8xf32>
      %c0_44 = arith.constant 0 : index
      %c0_45 = arith.constant 0 : index
      %131 = vector.load %arg7[%c0_44, %c0_45] : memref<1x8xf32, #tpu.memory_space<vmem>>, vector<1x8xf32>
      %132 = vector.shape_cast %131 : vector<1x8xf32> to vector<1x1x8xf32>
      %133 = vector.broadcast %132 : vector<1x1x8xf32> to vector<2x64x8xf32>
      %134 = arith.addf %130, %133 : vector<2x64x8xf32>
      %c0_46 = arith.constant 0 : index
      %c0_47 = arith.constant 0 : index
      %c0_48 = arith.constant 0 : index
      %135 = vector.load %arg8[%c0_46, %c0_47, %c0_48] : memref<2x64x8xf32, #tpu.memory_space<vmem>>, vector<2x64x8xf32>
      tpu.vector_store %arg8[%c0_46, %c0_47, %c0_48], %134 {strides = array<i32>} : memref<2x64x8xf32, #tpu.memory_space<vmem>>, vector<2x64x8xf32>,
    } else {
    }
    return
  }
  func.func @transform_0(%arg0: i32) -> (i32, i32, i32, i32, i32) {
    %c0_i32 = arith.constant 0 : i32
    %c0_i32_0 = arith.constant 0 : i32
    %c0_i32_1 = arith.constant 0 : i32
    %c0_i32_2 = arith.constant 0 : i32
    %c0_i32_3 = arith.constant 0 : i32
    return %arg0, %c0_i32, %c0_i32_0, %c0_i32_1, %c0_i32_2 : i32, i32, i32, i32, i32
  }
  func.func @transform_1(%arg0: i32) -> (i32, i32) {
    %c0_i32 = arith.constant 0 : i32
    %c0_i32_0 = arith.constant 0 : i32
    %c0_i32_1 = arith.constant 0 : i32
    return %c0_i32, %c0_i32_0 : i32, i32
  }
  func.func @transform_2(%arg0: i32) -> (i32, i32) {
    %c0_i32 = arith.constant 0 : i32
    %c0_i32_0 = arith.constant 0 : i32
    %c0_i32_1 = arith.constant 0 : i32
    return %c0_i32, %c0_i32_0 : i32, i32
  }
  func.func @transform_3(%arg0: i32) -> (i32, i32) {
    %c0_i32 = arith.constant 0 : i32
    %c0_i32_0 = arith.constant 0 : i32
    %c0_i32_1 = arith.constant 0 : i32
    return %c0_i32, %c0_i32_0 : i32, i32
  }
  func.func @transform_4(%arg0: i32) -> (i32, i32) {
    %c0_i32 = arith.constant 0 : i32
    %c0_i32_0 = arith.constant 0 : i32
    %c0_i32_1 = arith.constant 0 : i32
    return %c0_i32, %c0_i32_0 : i32, i32
  }
  func.func @transform_5(%arg0: i32) -> (i32, i32) {
    %c0_i32 = arith.constant 0 : i32
    %c0_i32_0 = arith.constant 0 : i32
    %c0_i32_1 = arith.constant 0 : i32
    return %c0_i32, %c0_i32_0 : i32, i32
  }
  func.func @transform_6(%arg0: i32) -> (i32, i32) {
    %c0_i32 = arith.constant 0 : i32
    %c0_i32_0 = arith.constant 0 : i32
    %c0_i32_1 = arith.constant 0 : i32
    return %c0_i32, %c0_i32_0 : i32, i32
  }
  func.func @transform_7(%arg0: i32) -> (i32, i32, i32) {
    %c0_i32 = arith.constant 0 : i32
    %c0_i32_0 = arith.constant 0 : i32
    %c0_i32_1 = arith.constant 0 : i32
    %c0_i32_2 = arith.constant 0 : i32
    return %c0_i32, %c0_i32_0, %c0_i32_1 : i32, i32, i32
  }
}

</mosaic_0001>

<llo_original>
// kernel: tpu_custom_call.1
$region0: #{tpu_custom_call.1}
  #allocation0 [shape = 'u32[]', space=smem, size = 0x4, offset = 0x4, fixed_abs, tag = 'smem constant byte address 0x4 - core index']
  #allocation1 [shape = 'u32[144,128]{1,0:T(1,128)}', space=vmem, size = 0x12000, scoped, tag = 'internal scratch']
  %s0 = inlined_call_operand.vmem [shape: f32[2,2,18,9,4], index: 0, kind: input, shape index: {}]
  %s1 = inlined_call_operand.vmem [shape: f32[36,8], index: 1, kind: input, shape index: {}]
  %s2 = inlined_call_operand.vmem [shape: f32[1,8], index: 2, kind: input, shape index: {}]
  %s3 = inlined_call_operand.vmem [shape: f32[128,8], index: 3, kind: input, shape index: {}]
  %s4 = inlined_call_operand.vmem [shape: f32[1,8], index: 4, kind: input, shape index: {}]
  %s5 = inlined_call_operand.vmem [shape: f32[1,8], index: 5, kind: input, shape index: {}]
  %s6 = inlined_call_operand.vmem [shape: f32[1,8], index: 6, kind: input, shape index: {}]
  %s7 = inlined_call_operand.vmem [shape: f32[2,64,8], index: 7, kind: output, shape index: {}]
  %s8 = sld [smem:[#allocation0]]
  $region65: #{tpu_custom_call.1} parent=0
    _
  %s10 = ssub.s32 1, %s8
  %s11 = scalar_select 0, %s10, %s8
  loop: start=0, step=1, limit=4
  $region2: #{tpu_custom_call.1} parent=0 // loop_pre_header
    _
  $region3: #{tpu_custom_call.1} parent=0 // loop_header
    %s13 = sphi 0, %s17
    %p14 = scmp.ge.s32.totalorder %s13, 4
    %s23 = sphi 0, %s25
    %s26 = sphi 0, %s23
    %s27 = sphi 0, %s26
    %s43 = sphi 0, %s27
    %s47 = sphi 0, %s47
    %s49 = sphi 0, %s47
    %s50 = sphi 0, %s49
    %s64 = sphi 0, %s50
    %s68 = sphi 0, %s68
    %s70 = sphi 0, %s68
    %s71 = sphi 0, %s70
    %s85 = sphi 0, %s71
    %s89 = sphi 0, %s89
    %s91 = sphi 0, %s89
    %s92 = sphi 0, %s91
    %s106 = sphi 0, %s92
    %s110 = sphi 0, %s110
    %s112 = sphi 0, %s110
    %s113 = sphi 0, %s112
    %s127 = sphi 0, %s113
    %s131 = sphi 0, %s131
    %s133 = sphi 0, %s131
    %s134 = sphi 0, %s133
    %s148 = sphi 0, %s134
    %s152 = sphi 0, %s152
    %s154 = sphi 0, %s152
    %s155 = sphi 0, %s154
    %s169 = sphi 0, %s155
    %s173 = sphi 0, %s173
    %s175 = sphi 0, %s173
    %s176 = sphi 0, %s175
    %s190 = sphi 0, %s176
  $region4: #{tpu_custom_call.1} parent=0 // loop_header_branch
    %16 = sbr.rel (%p14) target = $region8
  $region5: #{tpu_custom_call.1} parent=0 // loop_body
    %s18 = ssub.s32 %s13, 1
    %s19 = ssub.s32 %s13, 2
    %s20 = sadd.s32 %s13, 1
    %s21 = ssub.s32 %s13, %s20
    %p22 = scmp.eq.s32.totalorder %s21, 0
    %s24 = sadd.s32 %s23, 1
    %s25 = scalar_select %p22, %s23, %s24
    %p28 = pneg %p22
    %p29 = scmp.eq.s32.totalorder %s13, 1
    %p30 = por %p28, %p29
    %p31 = scmp.ne.s32.totalorder %s23, %s26
    %p32 = scmp.eq.s32.totalorder %s13, 0
    %p33 = por %p31, %p32
    %p34 = scmp.ne.s32.totalorder %s23, %s26
    %p35 = scmp.eq.s32.totalorder %s18, 1
    %p36 = por %p34, %p35
    %p37 = scmp.ne.s32.totalorder %s26, %s27
    %p38 = scmp.eq.s32.totalorder %s18, 0
    %p39 = por %p37, %p38
    %p40 = scmp.ne.s32.totalorder %s26, %s27
    %p41 = scmp.eq.s32.totalorder %s19, 1
    %p42 = por %p40, %p41
    %p44 = scmp.ne.s32.totalorder %s27, %s43
    %p45 = scmp.eq.s32.totalorder %s19, 0
    %p46 = por %p44, %p45
    %s48 = sadd.s32 %s47, 1
    %p51 = scmp.eq.s32.totalorder %s13, 1
    %p52 = scmp.ne.s32.totalorder %s47, %s49
    %p53 = scmp.eq.s32.totalorder %s13, 0
    %p54 = por %p52, %p53
    %p55 = scmp.ne.s32.totalorder %s47, %s49
    %p56 = scmp.eq.s32.totalorder %s18, 1
    %p57 = por %p55, %p56
    %p58 = scmp.ne.s32.totalorder %s49, %s50
    %p59 = scmp.eq.s32.totalorder %s18, 0
    %p60 = por %p58, %p59
    %p61 = scmp.ne.s32.totalorder %s49, %s50
    %p62 = scmp.eq.s32.totalorder %s19, 1
    %p63 = por %p61, %p62
    %p65 = scmp.ne.s32.totalorder %s50, %s64
    %p66 = scmp.eq.s32.totalorder %s19, 0
    %p67 = por %p65, %p66
    %s69 = sadd.s32 %s68, 1
    %p72 = scmp.eq.s32.totalorder %s13, 1
    %p73 = scmp.ne.s32.totalorder %s68, %s70
    %p74 = scmp.eq.s32.totalorder %s13, 0
    %p75 = por %p73, %p74
    %p76 = scmp.ne.s32.totalorder %s68, %s70
    %p77 = scmp.eq.s32.totalorder %s18, 1
    %p78 = por %p76, %p77
    %p79 = scmp.ne.s32.totalorder %s70, %s71
    %p80 = scmp.eq.s32.totalorder %s18, 0
    %p81 = por %p79, %p80
    %p82 = scmp.ne.s32.totalorder %s70, %s71
    %p83 = scmp.eq.s32.totalorder %s19, 1
    %p84 = por %p82, %p83
    %p86 = scmp.ne.s32.totalorder %s71, %s85
    %p87 = scmp.eq.s32.totalorder %s19, 0
    %p88 = por %p86, %p87
    %s90 = sadd.s32 %s89, 1
    %p93 = scmp.eq.s32.totalorder %s13, 1
    %p94 = scmp.ne.s32.totalorder %s89, %s91
    %p95 = scmp.eq.s32.totalorder %s13, 0
    %p96 = por %p94, %p95
    %p97 = scmp.ne.s32.totalorder %s89, %s91
    %p98 = scmp.eq.s32.totalorder %s18, 1
    %p99 = por %p97, %p98
    %p100 = scmp.ne.s32.totalorder %s91, %s92
    %p101 = scmp.eq.s32.totalorder %s18, 0
    %p102 = por %p100, %p101
    %p103 = scmp.ne.s32.totalorder %s91, %s92
    %p104 = scmp.eq.s32.totalorder %s19, 1
    %p105 = por %p103, %p104
    %p107 = scmp.ne.s32.totalorder %s92, %s106
    %p108 = scmp.eq.s32.totalorder %s19, 0
    %p109 = por %p107, %p108
    %s111 = sadd.s32 %s110, 1
    %p114 = scmp.eq.s32.totalorder %s13, 1
    %p115 = scmp.ne.s32.totalorder %s110, %s112
    %p116 = scmp.eq.s32.totalorder %s13, 0
    %p117 = por %p115, %p116
    %p118 = scmp.ne.s32.totalorder %s110, %s112
    %p119 = scmp.eq.s32.totalorder %s18, 1
    %p120 = por %p118, %p119
    %p121 = scmp.ne.s32.totalorder %s112, %s113
    %p122 = scmp.eq.s32.totalorder %s18, 0
    %p123 = por %p121, %p122
    %p124 = scmp.ne.s32.totalorder %s112, %s113
    %p125 = scmp.eq.s32.totalorder %s19, 1
    %p126 = por %p124, %p125
    %p128 = scmp.ne.s32.totalorder %s113, %s127
    %p129 = scmp.eq.s32.totalorder %s19, 0
    %p130 = por %p128, %p129
    %s132 = sadd.s32 %s131, 1
    %p135 = scmp.eq.s32.totalorder %s13, 1
    %p136 = scmp.ne.s32.totalorder %s131, %s133
    %p137 = scmp.eq.s32.totalorder %s13, 0
    %p138 = por %p136, %p137
    %p139 = scmp.ne.s32.totalorder %s131, %s133
    %p140 = scmp.eq.s32.totalorder %s18, 1
    %p141 = por %p139, %p140
    %p142 = scmp.ne.s32.totalorder %s133, %s134
    %p143 = scmp.eq.s32.totalorder %s18, 0
    %p144 = por %p142, %p143
    %p145 = scmp.ne.s32.totalorder %s133, %s134
    %p146 = scmp.eq.s32.totalorder %s19, 1
    %p147 = por %p145, %p146
    %p149 = scmp.ne.s32.totalorder %s134, %s148
    %p150 = scmp.eq.s32.totalorder %s19, 0
    %p151 = por %p149, %p150
    %s153 = sadd.s32 %s152, 1
    %p156 = scmp.eq.s32.totalorder %s13, 1
    %p157 = scmp.ne.s32.totalorder %s152, %s154
    %p158 = scmp.eq.s32.totalorder %s13, 0
    %p159 = por %p157, %p158
    %p160 = scmp.ne.s32.totalorder %s152, %s154
    %p161 = scmp.eq.s32.totalorder %s18, 1
    %p162 = por %p160, %p161
    %p163 = scmp.ne.s32.totalorder %s154, %s155
    %p164 = scmp.eq.s32.totalorder %s18, 0
    %p165 = por %p163, %p164
    %p166 = scmp.ne.s32.totalorder %s154, %s155
    %p167 = scmp.eq.s32.totalorder %s19, 1
    %p168 = por %p166, %p167
    %p170 = scmp.ne.s32.totalorder %s155, %s169
    %p171 = scmp.eq.s32.totalorder %s19, 0
    %p172 = por %p170, %p171
    %s174 = sadd.s32 %s173, 1
    %p177 = scmp.eq.s32.totalorder %s13, 1
    %p178 = scmp.ne.s32.totalorder %s173, %s175
    %p179 = scmp.eq.s32.totalorder %s13, 0
    %p180 = por %p178, %p179
    %p181 = scmp.ne.s32.totalorder %s173, %s175
    %p182 = scmp.eq.s32.totalorder %s18, 1
    %p183 = por %p181, %p182
    %p184 = scmp.ne.s32.totalorder %s175, %s176
    %p185 = scmp.eq.s32.totalorder %s18, 0
    %p186 = por %p184, %p185
    %p187 = scmp.ne.s32.totalorder %s175, %s176
    %p188 = scmp.eq.s32.totalorder %s19, 1
    %p189 = por %p187, %p188
    %p191 = scmp.ne.s32.totalorder %s176, %s190
    %p192 = scmp.eq.s32.totalorder %s19, 0
    %p193 = por %p191, %p192
    %p194 = scmp.le.s32.totalorder 1, %s13
    %p195 = scmp.lt.s32.totalorder %s13, 3
    %p196 = pnand %p194, %p195
    %p197 = pneg %p196
    // Predicated region
    $region9: #{tpu_custom_call.1} parent=5 // pred_check
      _
    $region10: #{tpu_custom_call.1} parent=5 // pred_check_branch
      %199 = sbr.rel (%p196) target = $region12
    $region11: #{tpu_custom_call.1} parent=5 // pred_region
      %s200 = ssub.s32 %s13, 1
      // Predicated region
      $region13: #{tpu_custom_call.1} parent=11 // pred_check
        %p201 = pneg %p60
      $region14: #{tpu_custom_call.1} parent=11 // pred_check_branch
        %203 = sbr.rel (%p201) target = $region16
      $region15: #{tpu_custom_call.1} parent=11 // pred_region
        _
      $region16: #{tpu_custom_call.1} parent=11 // pred_fallthru
        _
      // Predicated region
      $region17: #{tpu_custom_call.1} parent=11 // pred_check
        %p204 = pneg %p81
      $region18: #{tpu_custom_call.1} parent=11 // pred_check_branch
        %206 = sbr.rel (%p204) target = $region20
      $region19: #{tpu_custom_call.1} parent=11 // pred_region
        _
      $region20: #{tpu_custom_call.1} parent=11 // pred_fallthru
        _
      // Predicated region
      $region21: #{tpu_custom_call.1} parent=11 // pred_check
        %p207 = pneg %p102
      $region22: #{tpu_custom_call.1} parent=11 // pred_check_branch
        %209 = sbr.rel (%p207) target = $region24
      $region23: #{tpu_custom_call.1} parent=11 // pred_region
        _
      $region24: #{tpu_custom_call.1} parent=11 // pred_fallthru
        _
      // Predicated region
      $region25: #{tpu_custom_call.1} parent=11 // pred_check
        %p210 = pneg %p123
      $region26: #{tpu_custom_call.1} parent=11 // pred_check_branch
        %212 = sbr.rel (%p210) target = $region28
      $region27: #{tpu_custom_call.1} parent=11 // pred_region
        _
      $region28: #{tpu_custom_call.1} parent=11 // pred_fallthru
        _
      // Predicated region
      $region29: #{tpu_custom_call.1} parent=11 // pred_check
        %p213 = pneg %p144
      $region30: #{tpu_custom_call.1} parent=11 // pred_check_branch
        %215 = sbr.rel (%p213) target = $region32
      $region31: #{tpu_custom_call.1} parent=11 // pred_region
        _
      $region32: #{tpu_custom_call.1} parent=11 // pred_fallthru
        _
      // Predicated region
      $region33: #{tpu_custom_call.1} parent=11 // pred_check
        %p216 = pneg %p165
      $region34: #{tpu_custom_call.1} parent=11 // pred_check_branch
        %218 = sbr.rel (%p216) target = $region36
      $region35: #{tpu_custom_call.1} parent=11 // pred_region
        _
      $region36: #{tpu_custom_call.1} parent=11 // pred_fallthru
        _
    $region12: #{tpu_custom_call.1} parent=5 // pred_fallthru
      _
    %p219 = scmp.lt.s32.totalorder %s13, 2
    // Predicated region
    $region37: #{tpu_custom_call.1} parent=5 // pred_check
      %p220 = pneg %p219
    $region38: #{tpu_custom_call.1} parent=5 // pred_check_branch
      %222 = sbr.rel (%p220) target = $region40
    $region39: #{tpu_custom_call.1} parent=5 // pred_region
      // Predicated region
      $region41: #{tpu_custom_call.1} parent=39 // pred_check
        %p223 = pneg %p33
      $region42: #{tpu_custom_call.1} parent=39 // pred_check_branch
        %225 = sbr.rel (%p223) target = $region44
      $region43: #{tpu_custom_call.1} parent=39 // pred_region
        %p226 = scmp.lt.s32.totalorder %s13, 1
        %s227 = scalar_select %p226, %s13, 1
        %s228 = smul.addr %s227, 72
        %s229 = smul.addr %s228, 8
        %s230 = scalar_lea.vmem %s0, %s229
      $region44: #{tpu_custom_call.1} parent=39 // pred_fallthru
        _
    $region40: #{tpu_custom_call.1} parent=5 // pred_fallthru
      _
    %p231 = scmp.le.s32.totalorder 1, %s13
    %p232 = scmp.lt.s32.totalorder %s13, 3
    %p233 = pnand %p231, %p232
    %p234 = pneg %p233
    // Predicated region
    $region45: #{tpu_custom_call.1} parent=5 // pred_check
      _
    $region46: #{tpu_custom_call.1} parent=5 // pred_check_branch
      %236 = sbr.rel (%p233) target = $region48
    $region47: #{tpu_custom_call.1} parent=5 // pred_region
      %s237 = ssub.s32 %s13, 1
      %p238 = scmp.lt.s32.totalorder %s18, 1
      %s239 = scalar_select %p238, %s18, 1
      %s240 = smul.addr %s239, 72
      %s241 = smul.addr %s240, 8
      %s242 = scalar_lea.vmem %s0, %s241
      %p243 = pneg %p39
      %p244 = pneg %p36
      %p245 = pneg %p60
      %p246 = pneg %p57
      %p247 = pneg %p81
      %p248 = pneg %p78
      %p249 = pneg %p102
      %p250 = pneg %p99
      %p251 = pneg %p123
      %p252 = pneg %p120
      %p253 = pneg %p144
      %p254 = pneg %p141
      %p255 = pneg %p165
      %p256 = pneg %p162
      %p257 = pneg %p186
      %p258 = pneg %p183
      %p259 = scmp.lt.s32.totalorder %s18, 1
      %s260 = scalar_select %p259, %s18, 1
      %s261 = smul.addr %s260, 72
      %s262 = smul.addr %s261, 8
      %s263 = scalar_lea.vmem %s0, %s262
      %v264 = vld [vmem:[%s263] sm:$0xff]
      %v265 = vld [vmem:[%s263 + $0x8] sm:$0x1]
      %v266 = vld [vmem:[%s263 + $0x10] sm:$0xff]
      %v267 = vld [vmem:[%s263 + $0x18] sm:$0x1]
      %v268 = vld [vmem:[%s263 + $0x20] sm:$0xff]
      %v269 = vld [vmem:[%s263 + $0x28] sm:$0x1]
      %v270 = vld [vmem:[%s263 + $0x30] sm:$0xff]
      %v271 = vld [vmem:[%s263 + $0x38] sm:$0x1]
      %v272 = vld [vmem:[%s263 + $0x40] sm:$0xff]
      %v273 = vld [vmem:[%s263 + $0x48] sm:$0x1]
      %v274 = vld [vmem:[%s263 + $0x50] sm:$0xff]
      %v275 = vld [vmem:[%s263 + $0x58] sm:$0x1]
      %v276 = vld [vmem:[%s263 + $0x60] sm:$0xff]
      %v277 = vld [vmem:[%s263 + $0x68] sm:$0x1]
      %v278 = vld [vmem:[%s263 + $0x70] sm:$0xff]
      %v279 = vld [vmem:[%s263 + $0x78] sm:$0x1]
      %v280 = vld [vmem:[%s263 + $0x80] sm:$0xff]
      %v281 = vld [vmem:[%s263 + $0x88] sm:$0x1]
      %v282 = vld [vmem:[%s263 + $0x90] sm:$0xff]
      %v283 = vld [vmem:[%s263 + $0x98] sm:$0x1]
      %v284 = vld [vmem:[%s263 + $0xa0] sm:$0xff]
      %v285 = vld [vmem:[%s263 + $0xa8] sm:$0x1]
      %v286 = vld [vmem:[%s263 + $0xb0] sm:$0xff]
      %v287 = vld [vmem:[%s263 + $0xb8] sm:$0x1]
      %v288 = vld [vmem:[%s263 + $0xc0] sm:$0xff]
      %v289 = vld [vmem:[%s263 + $0xc8] sm:$0x1]
      %v290 = vld [vmem:[%s263 + $0xd0] sm:$0xff]
      %v291 = vld [vmem:[%s263 + $0xd8] sm:$0x1]
      %v292 = vld [vmem:[%s263 + $0xe0] sm:$0xff]
      %v293 = vld [vmem:[%s263 + $0xe8] sm:$0x1]
      %v294 = vld [vmem:[%s263 + $0xf0] sm:$0xff]
      %v295 = vld [vmem:[%s263 + $0xf8] sm:$0x1]
      %v296 = vld [vmem:[%s263 + $0x100] sm:$0xff]
      %v297 = vld [vmem:[%s263 + $0x108] sm:$0x1]
      %v298 = vld [vmem:[%s263 + $0x110] sm:$0xff]
      %v299 = vld [vmem:[%s263 + $0x118] sm:$0x1]
      %s300 = scalar_lea.vmem %s263, 288
      %v301 = vld [vmem:[%s300] sm:$0xff]
      %v302 = vld [vmem:[%s300 + $0x8] sm:$0x1]
      %v303 = vld [vmem:[%s300 + $0x10] sm:$0xff]
      %v304 = vld [vmem:[%s300 + $0x18] sm:$0x1]
      %v305 = vld [vmem:[%s300 + $0x20] sm:$0xff]
      %v306 = vld [vmem:[%s300 + $0x28] sm:$0x1]
      %v307 = vld [vmem:[%s300 + $0x30] sm:$0xff]
      %v308 = vld [vmem:[%s300 + $0x38] sm:$0x1]
      %v309 = vld [vmem:[%s300 + $0x40] sm:$0xff]
      %v310 = vld [vmem:[%s300 + $0x48] sm:$0x1]
      %v311 = vld [vmem:[%s300 + $0x50] sm:$0xff]
      %v312 = vld [vmem:[%s300 + $0x58] sm:$0x1]
      %v313 = vld [vmem:[%s300 + $0x60] sm:$0xff]
      %v314 = vld [vmem:[%s300 + $0x68] sm:$0x1]
      %v315 = vld [vmem:[%s300 + $0x70] sm:$0xff]
      %v316 = vld [vmem:[%s300 + $0x78] sm:$0x1]
      %v317 = vld [vmem:[%s300 + $0x80] sm:$0xff]
      %v318 = vld [vmem:[%s300 + $0x88] sm:$0x1]
      %v319 = vld [vmem:[%s300 + $0x90] sm:$0xff]
      %v320 = vld [vmem:[%s300 + $0x98] sm:$0x1]
      %v321 = vld [vmem:[%s300 + $0xa0] sm:$0xff]
      %v322 = vld [vmem:[%s300 + $0xa8] sm:$0x1]
      %v323 = vld [vmem:[%s300 + $0xb0] sm:$0xff]
      %v324 = vld [vmem:[%s300 + $0xb8] sm:$0x1]
      %v325 = vld [vmem:[%s300 + $0xc0] sm:$0xff]
      %v326 = vld [vmem:[%s300 + $0xc8] sm:$0x1]
      %v327 = vld [vmem:[%s300 + $0xd0] sm:$0xff]
      %v328 = vld [vmem:[%s300 + $0xd8] sm:$0x1]
      %v329 = vld [vmem:[%s300 + $0xe0] sm:$0xff]
      %v330 = vld [vmem:[%s300 + $0xe8] sm:$0x1]
      %v331 = vld [vmem:[%s300 + $0xf0] sm:$0xff]
      %v332 = vld [vmem:[%s300 + $0xf8] sm:$0x1]
      %v333 = vld [vmem:[%s300 + $0x100] sm:$0xff]
      %v334 = vld [vmem:[%s300 + $0x108] sm:$0x1]
      %v335 = vld [vmem:[%s300 + $0x110] sm:$0xff]
      %v336 = vld [vmem:[%s300 + $0x118] sm:$0x1]
      %353 = vrot.lane.b32.xlu0 %v301, 4
      %v354 = vpop.permute.xlu0 %353
      %355 = vrot.lane.b32.xlu0 %v303, 4
      %v356 = vpop.permute.xlu0 %355
      %357 = vrot.lane.b32.xlu0 %v305, 4
      %v358 = vpop.permute.xlu0 %357
      %359 = vrot.lane.b32.xlu0 %v307, 4
      %v360 = vpop.permute.xlu0 %359
      %361 = vrot.lane.b32.xlu0 %v309, 4
      %v362 = vpop.permute.xlu0 %361
      %363 = vrot.lane.b32.xlu0 %v311, 4
      %v364 = vpop.permute.xlu0 %363
      %365 = vrot.lane.b32.xlu0 %v313, 4
      %v366 = vpop.permute.xlu0 %365
      %367 = vrot.lane.b32.xlu0 %v315, 4
      %v368 = vpop.permute.xlu0 %367
      %369 = vrot.lane.b32.xlu0 %v317, 4
      %v370 = vpop.permute.xlu0 %369
      %371 = vrot.lane.b32.xlu0 %v319, 4
      %v372 = vpop.permute.xlu0 %371
      %373 = vrot.lane.b32.xlu0 %v321, 4
      %v374 = vpop.permute.xlu0 %373
      %375 = vrot.lane.b32.xlu0 %v323, 4
      %v376 = vpop.permute.xlu0 %375
      %377 = vrot.lane.b32.xlu0 %v325, 4
      %v378 = vpop.permute.xlu0 %377
      %379 = vrot.lane.b32.xlu0 %v327, 4
      %v380 = vpop.permute.xlu0 %379
      %381 = vrot.lane.b32.xlu0 %v329, 4
      %v382 = vpop.permute.xlu0 %381
      %383 = vrot.lane.b32.xlu0 %v331, 4
      %v384 = vpop.permute.xlu0 %383
      %vm433 = vcmask 1046528
      %v434 = vrot.slane %v264, 1
      %v435 = vrot.slane %v265, 1
      %v436 = vsel %vm433, %v434, %v435
      %v437 = vrot.slane %v266, 1
      %v438 = vrot.slane %v267, 1
      %v439 = vsel %vm433, %v437, %v438
      %v440 = vrot.slane %v268, 1
      %v441 = vrot.slane %v269, 1
      %v442 = vsel %vm433, %v440, %v441
      %v443 = vrot.slane %v270, 1
      %v444 = vrot.slane %v271, 1
      %v445 = vsel %vm433, %v443, %v444
      %v446 = vrot.slane %v272, 1
      %v447 = vrot.slane %v273, 1
      %v448 = vsel %vm433, %v446, %v447
      %v449 = vrot.slane %v274, 1
      %v450 = vrot.slane %v275, 1
      %v451 = vsel %vm433, %v449, %v450
      %v452 = vrot.slane %v276, 1
      %v453 = vrot.slane %v277, 1
      %v454 = vsel %vm433, %v452, %v453
      %v455 = vrot.slane %v278, 1
      %v456 = vrot.slane %v279, 1
      %v457 = vsel %vm433, %v455, %v456
      %v458 = vrot.slane %v280, 1
      %v459 = vrot.slane %v281, 1
      %v460 = vsel %vm433, %v458, %v459
      %v461 = vrot.slane %v282, 1
      %v462 = vrot.slane %v283, 1
      %v463 = vsel %vm433, %v461, %v462
      %v464 = vrot.slane %v284, 1
      %v465 = vrot.slane %v285, 1
      %v466 = vsel %vm433, %v464, %v465
      %v467 = vrot.slane %v286, 1
      %v468 = vrot.slane %v287, 1
      %v469 = vsel %vm433, %v467, %v468
      %v470 = vrot.slane %v288, 1
      %v471 = vrot.slane %v289, 1
      %v472 = vsel %vm433, %v470, %v471
      %v473 = vrot.slane %v290, 1
      %v474 = vrot.slane %v291, 1
      %v475 = vsel %vm433, %v473, %v474
      %v476 = vrot.slane %v292, 1
      %v477 = vrot.slane %v293, 1
      %v478 = vsel %vm433, %v476, %v477
      %v479 = vrot.slane %v294, 1
      %v480 = vrot.slane %v295, 1
      %v481 = vsel %vm433, %v479, %v480
      %482 = vrot.lane.b32.xlu0 %v436, 8
      %v483 = vpop.permute.xlu0 %482
      %484 = vrot.lane.b32.xlu0 %v439, 8
      %v485 = vpop.permute.xlu0 %484
      %486 = vrot.lane.b32.xlu0 %v442, 8
      %v487 = vpop.permute.xlu0 %486
      %488 = vrot.lane.b32.xlu0 %v445, 8
      %v489 = vpop.permute.xlu0 %488
      %490 = vrot.lane.b32.xlu0 %v448, 8
      %v491 = vpop.permute.xlu0 %490
      %492 = vrot.lane.b32.xlu0 %v451, 8
      %v493 = vpop.permute.xlu0 %492
      %494 = vrot.lane.b32.xlu0 %v454, 8
      %v495 = vpop.permute.xlu0 %494
      %496 = vrot.lane.b32.xlu0 %v457, 8
      %v497 = vpop.permute.xlu0 %496
      %498 = vrot.lane.b32.xlu0 %v460, 8
      %v499 = vpop.permute.xlu0 %498
      %500 = vrot.lane.b32.xlu0 %v463, 8
      %v501 = vpop.permute.xlu0 %500
      %502 = vrot.lane.b32.xlu0 %v466, 8
      %v503 = vpop.permute.xlu0 %502
      %504 = vrot.lane.b32.xlu0 %v469, 8
      %v505 = vpop.permute.xlu0 %504
      %506 = vrot.lane.b32.xlu0 %v472, 8
      %v507 = vpop.permute.xlu0 %506
      %508 = vrot.lane.b32.xlu0 %v475, 8
      %v509 = vpop.permute.xlu0 %508
      %510 = vrot.lane.b32.xlu0 %v478, 8
      %v511 = vpop.permute.xlu0 %510
      %512 = vrot.lane.b32.xlu0 %v481, 8
      %v513 = vpop.permute.xlu0 %512
      %531 = vrot.lane.b32.xlu0 %v266, 12
      %v532 = vpop.permute.xlu0 %531
      %533 = vrot.lane.b32.xlu0 %v268, 12
      %v534 = vpop.permute.xlu0 %533
      %535 = vrot.lane.b32.xlu0 %v270, 12
      %v536 = vpop.permute.xlu0 %535
      %537 = vrot.lane.b32.xlu0 %v272, 12
      %v538 = vpop.permute.xlu0 %537
      %539 = vrot.lane.b32.xlu0 %v274, 12
      %v540 = vpop.permute.xlu0 %539
      %541 = vrot.lane.b32.xlu0 %v276, 12
      %v542 = vpop.permute.xlu0 %541
      %543 = vrot.lane.b32.xlu0 %v278, 12
      %v544 = vpop.permute.xlu0 %543
      %545 = vrot.lane.b32.xlu0 %v280, 12
      %v546 = vpop.permute.xlu0 %545
      %547 = vrot.lane.b32.xlu0 %v282, 12
      %v548 = vpop.permute.xlu0 %547
      %549 = vrot.lane.b32.xlu0 %v284, 12
      %v550 = vpop.permute.xlu0 %549
      %551 = vrot.lane.b32.xlu0 %v286, 12
      %v552 = vpop.permute.xlu0 %551
      %553 = vrot.lane.b32.xlu0 %v288, 12
      %v554 = vpop.permute.xlu0 %553
      %555 = vrot.lane.b32.xlu0 %v290, 12
      %v556 = vpop.permute.xlu0 %555
      %557 = vrot.lane.b32.xlu0 %v292, 12
      %v558 = vpop.permute.xlu0 %557
      %559 = vrot.lane.b32.xlu0 %v294, 12
      %v560 = vpop.permute.xlu0 %559
      %561 = vrot.lane.b32.xlu0 %v296, 12
      %v562 = vpop.permute.xlu0 %561
      %580 = vrot.lane.b32.xlu0 %v303, 16
      %v581 = vpop.permute.xlu0 %580
      %582 = vrot.lane.b32.xlu0 %v305, 16
      %v583 = vpop.permute.xlu0 %582
      %584 = vrot.lane.b32.xlu0 %v307, 16
      %v585 = vpop.permute.xlu0 %584
      %586 = vrot.lane.b32.xlu0 %v309, 16
      %v587 = vpop.permute.xlu0 %586
      %588 = vrot.lane.b32.xlu0 %v311, 16
      %v589 = vpop.permute.xlu0 %588
      %590 = vrot.lane.b32.xlu0 %v313, 16
      %v591 = vpop.permute.xlu0 %590
      %592 = vrot.lane.b32.xlu0 %v315, 16
      %v593 = vpop.permute.xlu0 %592
      %594 = vrot.lane.b32.xlu0 %v317, 16
      %v595 = vpop.permute.xlu0 %594
      %596 = vrot.lane.b32.xlu0 %v319, 16
      %v597 = vpop.permute.xlu0 %596
      %598 = vrot.lane.b32.xlu0 %v321, 16
      %v599 = vpop.permute.xlu0 %598
      %600 = vrot.lane.b32.xlu0 %v323, 16
      %v601 = vpop.permute.xlu0 %600
      %602 = vrot.lane.b32.xlu0 %v325, 16
      %v603 = vpop.permute.xlu0 %602
      %604 = vrot.lane.b32.xlu0 %v327, 16
      %v605 = vpop.permute.xlu0 %604
      %606 = vrot.lane.b32.xlu0 %v329, 16
      %v607 = vpop.permute.xlu0 %606
      %608 = vrot.lane.b32.xlu0 %v331, 16
      %v609 = vpop.permute.xlu0 %608
      %610 = vrot.lane.b32.xlu0 %v333, 16
      %v611 = vpop.permute.xlu0 %610
      %v629 = vrot.slane %v296, 1
      %v630 = vrot.slane %v297, 1
      %v631 = vsel %vm433, %v629, %v630
      %632 = vrot.lane.b32.xlu0 %v439, 20
      %v633 = vpop.permute.xlu0 %632
      %634 = vrot.lane.b32.xlu0 %v442, 20
      %v635 = vpop.permute.xlu0 %634
      %636 = vrot.lane.b32.xlu0 %v445, 20
      %v637 = vpop.permute.xlu0 %636
      %638 = vrot.lane.b32.xlu0 %v448, 20
      %v639 = vpop.permute.xlu0 %638
      %640 = vrot.lane.b32.xlu0 %v451, 20
      %v641 = vpop.permute.xlu0 %640
      %642 = vrot.lane.b32.xlu0 %v454, 20
      %v643 = vpop.permute.xlu0 %642
      %644 = vrot.lane.b32.xlu0 %v457, 20
      %v645 = vpop.permute.xlu0 %644
      %646 = vrot.lane.b32.xlu0 %v460, 20
      %v647 = vpop.permute.xlu0 %646
      %648 = vrot.lane.b32.xlu0 %v463, 20
      %v649 = vpop.permute.xlu0 %648
      %650 = vrot.lane.b32.xlu0 %v466, 20
      %v651 = vpop.permute.xlu0 %650
      %652 = vrot.lane.b32.xlu0 %v469, 20
      %v653 = vpop.permute.xlu0 %652
      %654 = vrot.lane.b32.xlu0 %v472, 20
      %v655 = vpop.permute.xlu0 %654
      %656 = vrot.lane.b32.xlu0 %v475, 20
      %v657 = vpop.permute.xlu0 %656
      %658 = vrot.lane.b32.xlu0 %v478, 20
      %v659 = vpop.permute.xlu0 %658
      %660 = vrot.lane.b32.xlu0 %v481, 20
      %v661 = vpop.permute.xlu0 %660
      %662 = vrot.lane.b32.xlu0 %v631, 20
      %v663 = vpop.permute.xlu0 %662
      %681 = vrot.lane.b32.xlu0 %v268, 24
      %v682 = vpop.permute.xlu0 %681
      %683 = vrot.lane.b32.xlu0 %v270, 24
      %v684 = vpop.permute.xlu0 %683
      %685 = vrot.lane.b32.xlu0 %v272, 24
      %v686 = vpop.permute.xlu0 %685
      %687 = vrot.lane.b32.xlu0 %v274, 24
      %v688 = vpop.permute.xlu0 %687
      %689 = vrot.lane.b32.xlu0 %v276, 24
      %v690 = vpop.permute.xlu0 %689
      %691 = vrot.lane.b32.xlu0 %v278, 24
      %v692 = vpop.permute.xlu0 %691
      %693 = vrot.lane.b32.xlu0 %v280, 24
      %v694 = vpop.permute.xlu0 %693
      %695 = vrot.lane.b32.xlu0 %v282, 24
      %v696 = vpop.permute.xlu0 %695
      %697 = vrot.lane.b32.xlu0 %v284, 24
      %v698 = vpop.permute.xlu0 %697
      %699 = vrot.lane.b32.xlu0 %v286, 24
      %v700 = vpop.permute.xlu0 %699
      %701 = vrot.lane.b32.xlu0 %v288, 24
      %v702 = vpop.permute.xlu0 %701
      %703 = vrot.lane.b32.xlu0 %v290, 24
      %v704 = vpop.permute.xlu0 %703
      %705 = vrot.lane.b32.xlu0 %v292, 24
      %v706 = vpop.permute.xlu0 %705
      %707 = vrot.lane.b32.xlu0 %v294, 24
      %v708 = vpop.permute.xlu0 %707
      %709 = vrot.lane.b32.xlu0 %v296, 24
      %v710 = vpop.permute.xlu0 %709
      %711 = vrot.lane.b32.xlu0 %v298, 24
      %v712 = vpop.permute.xlu0 %711
      %730 = vrot.lane.b32.xlu0 %v305, 28
      %v731 = vpop.permute.xlu0 %730
      %732 = vrot.lane.b32.xlu0 %v307, 28
      %v733 = vpop.permute.xlu0 %732
      %734 = vrot.lane.b32.xlu0 %v309, 28
      %v735 = vpop.permute.xlu0 %734
      %736 = vrot.lane.b32.xlu0 %v311, 28
      %v737 = vpop.permute.xlu0 %736
      %738 = vrot.lane.b32.xlu0 %v313, 28
      %v739 = vpop.permute.xlu0 %738
      %740 = vrot.lane.b32.xlu0 %v315, 28
      %v741 = vpop.permute.xlu0 %740
      %742 = vrot.lane.b32.xlu0 %v317, 28
      %v743 = vpop.permute.xlu0 %742
      %744 = vrot.lane.b32.xlu0 %v319, 28
      %v745 = vpop.permute.xlu0 %744
      %746 = vrot.lane.b32.xlu0 %v321, 28
      %v747 = vpop.permute.xlu0 %746
      %748 = vrot.lane.b32.xlu0 %v323, 28
      %v749 = vpop.permute.xlu0 %748
      %750 = vrot.lane.b32.xlu0 %v325, 28
      %v751 = vpop.permute.xlu0 %750
      %752 = vrot.lane.b32.xlu0 %v327, 28
      %v753 = vpop.permute.xlu0 %752
      %754 = vrot.lane.b32.xlu0 %v329, 28
      %v755 = vpop.permute.xlu0 %754
      %756 = vrot.lane.b32.xlu0 %v331, 28
      %v757 = vpop.permute.xlu0 %756
      %758 = vrot.lane.b32.xlu0 %v333, 28
      %v759 = vpop.permute.xlu0 %758
      %760 = vrot.lane.b32.xlu0 %v335, 28
      %v761 = vpop.permute.xlu0 %760
      %v779 = vrot.slane %v298, 1
      %v780 = vrot.slane %v299, 1
      %v781 = vsel %vm433, %v779, %v780
      %782 = vrot.lane.b32.xlu0 %v442, 32
      %v783 = vpop.permute.xlu0 %782
      %784 = vrot.lane.b32.xlu0 %v445, 32
      %v785 = vpop.permute.xlu0 %784
      %786 = vrot.lane.b32.xlu0 %v448, 32
      %v787 = vpop.permute.xlu0 %786
      %788 = vrot.lane.b32.xlu0 %v451, 32
      %v789 = vpop.permute.xlu0 %788
      %790 = vrot.lane.b32.xlu0 %v454, 32
      %v791 = vpop.permute.xlu0 %790
      %792 = vrot.lane.b32.xlu0 %v457, 32
      %v793 = vpop.permute.xlu0 %792
      %794 = vrot.lane.b32.xlu0 %v460, 32
      %v795 = vpop.permute.xlu0 %794
      %796 = vrot.lane.b32.xlu0 %v463, 32
      %v797 = vpop.permute.xlu0 %796
      %798 = vrot.lane.b32.xlu0 %v466, 32
      %v799 = vpop.permute.xlu0 %798
      %800 = vrot.lane.b32.xlu0 %v469, 32
      %v801 = vpop.permute.xlu0 %800
      %802 = vrot.lane.b32.xlu0 %v472, 32
      %v803 = vpop.permute.xlu0 %802
      %804 = vrot.lane.b32.xlu0 %v475, 32
      %v805 = vpop.permute.xlu0 %804
      %806 = vrot.lane.b32.xlu0 %v478, 32
      %v807 = vpop.permute.xlu0 %806
      %808 = vrot.lane.b32.xlu0 %v481, 32
      %v809 = vpop.permute.xlu0 %808
      %810 = vrot.lane.b32.xlu0 %v631, 32
      %v811 = vpop.permute.xlu0 %810
      %812 = vrot.lane.b32.xlu0 %v781, 32
      %v813 = vpop.permute.xlu0 %812
      %vm830 = vcmask 31744
      %v831 = vsel %vm830, %v264, %v354
      %v832 = vsel %vm830, %v266, %v356
      %v833 = vsel %vm830, %v268, %v358
      %v834 = vsel %vm830, %v270, %v360
      %v835 = vsel %vm830, %v272, %v362
      %v836 = vsel %vm830, %v274, %v364
      %v837 = vsel %vm830, %v276, %v366
      %v838 = vsel %vm830, %v278, %v368
      %v839 = vsel %vm830, %v280, %v370
      %v840 = vsel %vm830, %v282, %v372
      %v841 = vsel %vm830, %v284, %v374
      %v842 = vsel %vm830, %v286, %v376
      %v843 = vsel %vm830, %v288, %v378
      %v844 = vsel %vm830, %v290, %v380
      %v845 = vsel %vm830, %v292, %v382
      %v846 = vsel %vm830, %v294, %v384
      %vm847 = vcmask 64512
      %v848 = vsel %vm847, %v831, %v483
      %v849 = vsel %vm847, %v832, %v485
      %v850 = vsel %vm847, %v833, %v487
      %v851 = vsel %vm847, %v834, %v489
      %v852 = vsel %vm847, %v835, %v491
      %v853 = vsel %vm847, %v836, %v493
      %v854 = vsel %vm847, %v837, %v495
      %v855 = vsel %vm847, %v838, %v497
      %v856 = vsel %vm847, %v839, %v499
      %v857 = vsel %vm847, %v840, %v501
      %v858 = vsel %vm847, %v841, %v503
      %v859 = vsel %vm847, %v842, %v505
      %v860 = vsel %vm847, %v843, %v507
      %v861 = vsel %vm847, %v844, %v509
      %v862 = vsel %vm847, %v845, %v511
      %v863 = vsel %vm847, %v846, %v513
      %vm864 = vcmask 97280
      %v865 = vsel %vm864, %v848, %v532
      %v866 = vsel %vm864, %v849, %v534
      %v867 = vsel %vm864, %v850, %v536
      %v868 = vsel %vm864, %v851, %v538
      %v869 = vsel %vm864, %v852, %v540
      %v870 = vsel %vm864, %v853, %v542
      %v871 = vsel %vm864, %v854, %v544
      %v872 = vsel %vm864, %v855, %v546
      %v873 = vsel %vm864, %v856, %v548
      %v874 = vsel %vm864, %v857, %v550
      %v875 = vsel %vm864, %v858, %v552
      %v876 = vsel %vm864, %v859, %v554
      %v877 = vsel %vm864, %v860, %v556
      %v878 = vsel %vm864, %v861, %v558
      %v879 = vsel %vm864, %v862, %v560
      %v880 = vsel %vm864, %v863, %v562
      %vm881 = vcmask 130048
      %v882 = vsel %vm881, %v865, %v581
      %v883 = vsel %vm881, %v866, %v583
      %v884 = vsel %vm881, %v867, %v585
      %v885 = vsel %vm881, %v868, %v587
      %v886 = vsel %vm881, %v869, %v589
      %v887 = vsel %vm881, %v870, %v591
      %v888 = vsel %vm881, %v871, %v593
      %v889 = vsel %vm881, %v872, %v595
      %v890 = vsel %vm881, %v873, %v597
      %v891 = vsel %vm881, %v874, %v599
      %v892 = vsel %vm881, %v875, %v601
      %v893 = vsel %vm881, %v876, %v603
      %v894 = vsel %vm881, %v877, %v605
      %v895 = vsel %vm881, %v878, %v607
      %v896 = vsel %vm881, %v879, %v609
      %v897 = vsel %vm881, %v880, %v611
      %vm898 = vcmask 162816
      %v899 = vsel %vm898, %v882, %v633
      %v900 = vsel %vm898, %v883, %v635
      %v901 = vsel %vm898, %v884, %v637
      %v902 = vsel %vm898, %v885, %v639
      %v903 = vsel %vm898, %v886, %v641
      %v904 = vsel %vm898, %v887, %v643
      %v905 = vsel %vm898, %v888, %v645
      %v906 = vsel %vm898, %v889, %v647
      %v907 = vsel %vm898, %v890, %v649
      %v908 = vsel %vm898, %v891, %v651
      %v909 = vsel %vm898, %v892, %v653
      %v910 = vsel %vm898, %v893, %v655
      %v911 = vsel %vm898, %v894, %v657
      %v912 = vsel %vm898, %v895, %v659
      %v913 = vsel %vm898, %v896, %v661
      %v914 = vsel %vm898, %v897, %v663
      %vm915 = vcmask 195584
      %v916 = vsel %vm915, %v899, %v682
      %v917 = vsel %vm915, %v900, %v684
      %v918 = vsel %vm915, %v901, %v686
      %v919 = vsel %vm915, %v902, %v688
      %v920 = vsel %vm915, %v903, %v690
      %v921 = vsel %vm915, %v904, %v692
      %v922 = vsel %vm915, %v905, %v694
      %v923 = vsel %vm915, %v906, %v696
      %v924 = vsel %vm915, %v907, %v698
      %v925 = vsel %vm915, %v908, %v700
      %v926 = vsel %vm915, %v909, %v702
      %v927 = vsel %vm915, %v910, %v704
      %v928 = vsel %vm915, %v911, %v706
      %v929 = vsel %vm915, %v912, %v708
      %v930 = vsel %vm915, %v913, %v710
      %v931 = vsel %vm915, %v914, %v712
      %vm932 = vcmask 228352
      %v933 = vsel %vm932, %v916, %v731
      %v934 = vsel %vm932, %v917, %v733
      %v935 = vsel %vm932, %v918, %v735
      %v936 = vsel %vm932, %v919, %v737
      %v937 = vsel %vm932, %v920, %v739
      %v938 = vsel %vm932, %v921, %v741
      %v939 = vsel %vm932, %v922, %v743
      %v940 = vsel %vm932, %v923, %v745
      %v941 = vsel %vm932, %v924, %v747
      %v942 = vsel %vm932, %v925, %v749
      %v943 = vsel %vm932, %v926, %v751
      %v944 = vsel %vm932, %v927, %v753
      %v945 = vsel %vm932, %v928, %v755
      %v946 = vsel %vm932, %v929, %v757
      %v947 = vsel %vm932, %v930, %v759
      %v948 = vsel %vm932, %v931, %v761
      %vm949 = vcmask 261120
      %v950 = vsel %vm949, %v933, %v783
      %v951 = vsel %vm949, %v934, %v785
      %v952 = vsel %vm949, %v935, %v787
      %v953 = vsel %vm949, %v936, %v789
      %v954 = vsel %vm949, %v937, %v791
      %v955 = vsel %vm949, %v938, %v793
      %v956 = vsel %vm949, %v939, %v795
      %v957 = vsel %vm949, %v940, %v797
      %v958 = vsel %vm949, %v941, %v799
      %v959 = vsel %vm949, %v942, %v801
      %v960 = vsel %vm949, %v943, %v803
      %v961 = vsel %vm949, %v944, %v805
      %v962 = vsel %vm949, %v945, %v807
      %v963 = vsel %vm949, %v946, %v809
      %v964 = vsel %vm949, %v947, %v811
      %v965 = vsel %vm949, %v948, %v813
      %v966 = vld [vmem:[%s1] sm:$0xff]
      %v967 = vld [vmem:[%s1 + $0x8] sm:$0xff]
      %v968 = vld [vmem:[%s1 + $0x10] sm:$0xff]
      %v969 = vld [vmem:[%s1 + $0x18] sm:$0xff]
      %v970 = vld [vmem:[%s1 + $0x20] sm:$0xf]
      %v971 = vld [vmem:[%s2] sm:$0x1]
      %v973 = vlaneseq
      %v974 = vshrl.u32 %v973, 7
      %v975 = vsub.s32 0, %v974
      %v976 = vrot.slane %v971, %v975
      %vm978 = vcmask 293888
      %v980 = vsel %vm978, %v950, 0
      %v983 = vsel %vm978, %v951, 0
      %v986 = vsel %vm978, %v952, 0
      %v989 = vsel %vm978, %v953, 0
      %v992 = vsel %vm978, %v954, 0
      %v995 = vsel %vm978, %v955, 0
      %v998 = vsel %vm978, %v956, 0
      %v1001 = vsel %vm978, %v957, 0
      %v1004 = vsel %vm978, %v958, 0
      %v1007 = vsel %vm978, %v959, 0
      %v1010 = vsel %vm978, %v960, 0
      %v1013 = vsel %vm978, %v961, 0
      %v1016 = vsel %vm978, %v962, 0
      %v1019 = vsel %vm978, %v963, 0
      %v1022 = vsel %vm978, %v964, 0
      %v1025 = vsel %vm978, %v965, 0
      %vm1027 = vcmask 1043456
      %v1029 = vsel %vm1027, %v970, 0
      %1031 = vmatprep.subr.mxu0 0.0
      %1032 = vmatpush1.msra.mxu0 %v966
      %1033 = vmatprep.subr.mxu0 0.0
      %1034 = vmatpush1.msra.mxu0 %v967
      %1035 = vmatprep.subr.mxu0 0.0
      %1036 = vmatpush1.msra.mxu0 %v968
      %1037 = vmatprep.subr.mxu0 0.0
      %1038 = vmatpush1.msra.mxu0 %v969
      %1039 = vmatprep.subr.mxu0 0.0
      %1040 = vmatpush1.msra.mxu0 %v1029
      %1041 = vmatprep.subr.mxu0 0.0
      %1042 = vmatpush1.msra.mxu0 0.0
      %1043 = vmatprep.subr.mxu0 0.0
      %1044 = vmatpush1.msra.mxu0 0.0
      %1045 = vmatprep.subr.mxu0 0.0
      %1046 = vmatpush1.msra.mxu0 0.0
      %1047 = vmatprep.subr.mxu0 0.0
      %1048 = vmatpush1.msra.mxu0 0.0
      %1049 = vmatprep.subr.mxu0 0.0
      %1050 = vmatpush1.msra.mxu0 0.0
      %1051 = vmatprep.subr.mxu0 0.0
      %1052 = vmatpush1.msra.mxu0 0.0
      %1053 = vmatprep.subr.mxu0 0.0
      %1054 = vmatpush1.msra.mxu0 0.0
      %1055 = vmatprep.subr.mxu0 0.0
      %1056 = vmatpush1.msra.mxu0 0.0
      %1057 = vmatprep.subr.mxu0 0.0
      %1058 = vmatpush1.msra.mxu0 0.0
      %1059 = vmatprep.subr.mxu0 0.0
      %1060 = vmatpush1.msra.mxu0 0.0
      %1061 = vmatprep.subr.mxu0 0.0
      %1062 = vmatpush1.msra.mxu0 0.0
      %1063 = vmatprep.subr.mxu0 0.0
      %1064 = vmatpush1.msra.mxu0 0.0
      %1065 = vmatprep.subr.mxu0 0.0
      %1066 = vmatpush1.msra.mxu0 0.0
      %1067 = vmatprep.subr.mxu0 0.0
      %1068 = vmatpush1.msra.mxu0 0.0
      %1069 = vmatprep.subr.mxu0 0.0
      %1070 = vmatpush1.msra.mxu0 0.0
      %1071 = vmatprep.subr.mxu0 0.0
      %1072 = vmatpush1.msra.mxu0 0.0
      %1073 = vmatprep.subr.mxu0 0.0
      %1074 = vmatpush1.msra.mxu0 0.0
      %1075 = vmatprep.subr.mxu0 0.0
      %1076 = vmatpush1.msra.mxu0 0.0
      %1077 = vmatprep.subr.mxu0 0.0
      %1078 = vmatpush1.msra.mxu0 0.0
      %1079 = vmatprep.subr.mxu0 0.0
      %1080 = vmatpush1.msra.mxu0 0.0
      %1081 = vmatprep.subr.mxu0 0.0
      %1082 = vmatpush1.msra.mxu0 0.0
      %1083 = vmatprep.subr.mxu0 0.0
      %1084 = vmatpush1.msra.mxu0 0.0
      %1085 = vmatprep.subr.mxu0 0.0
      %1086 = vmatpush1.msra.mxu0 0.0
      %1087 = vmatprep.subr.mxu0 0.0
      %1088 = vmatpush1.msra.mxu0 0.0
      %1089 = vmatprep.subr.mxu0 0.0
      %1090 = vmatpush1.msra.mxu0 0.0
      %1091 = vmatprep.subr.mxu0 0.0
      %1092 = vmatpush1.msra.mxu0 0.0
      %1093 = vmatprep.subr.mxu0 0.0
      %1094 = vmatpush1.msra.mxu0 0.0
      %1095 = vmatprep.mubr.f32.mxu0 0.0
      %1096 = vmatmul.mubr.f32.gmra.mrb[0].mxu0 %v980
      %v1097 = vpop.f32.mrb[0].mxu0
      %v1098 = vadd.f32 %v976, %v1097
      %v1099 = vpop.f32.mrb[0].mxu0
      %1100 = vmatprep.mubr.f32.mxu0 0.0
      %1101 = vmatmul.mubr.f32.gmra.mrb[0].mxu0 %v983
      %v1102 = vpop.f32.mrb[0].mxu0
      %v1103 = vadd.f32 %v976, %v1102
      %v1104 = vpop.f32.mrb[0].mxu0
      %1105 = vmatprep.mubr.f32.mxu0 0.0
      %1106 = vmatmul.mubr.f32.gmra.mrb[0].mxu0 %v986
      %v1107 = vpop.f32.mrb[0].mxu0
      %v1108 = vadd.f32 %v976, %v1107
      %v1109 = vpop.f32.mrb[0].mxu0
      %1110 = vmatprep.mubr.f32.mxu0 0.0
      %1111 = vmatmul.mubr.f32.gmra.mrb[0].mxu0 %v989
      %v1112 = vpop.f32.mrb[0].mxu0
      %v1113 = vadd.f32 %v976, %v1112
      %v1114 = vpop.f32.mrb[0].mxu0
      %1115 = vmatprep.mubr.f32.mxu0 0.0
      %1116 = vmatmul.mubr.f32.gmra.mrb[0].mxu0 %v992
      %v1117 = vpop.f32.mrb[0].mxu0
      %v1118 = vadd.f32 %v976, %v1117
      %v1119 = vpop.f32.mrb[0].mxu0
      %1120 = vmatprep.mubr.f32.mxu0 0.0
      %1121 = vmatmul.mubr.f32.gmra.mrb[0].mxu0 %v995
      %v1122 = vpop.f32.mrb[0].mxu0
      %v1123 = vadd.f32 %v976, %v1122
      %v1124 = vpop.f32.mrb[0].mxu0
      %1125 = vmatprep.mubr.f32.mxu0 0.0
      %1126 = vmatmul.mubr.f32.gmra.mrb[0].mxu0 %v998
      %v1127 = vpop.f32.mrb[0].mxu0
      %v1128 = vadd.f32 %v976, %v1127
      %v1129 = vpop.f32.mrb[0].mxu0
      %1130 = vmatprep.mubr.f32.mxu0 0.0
      %1131 = vmatmul.mubr.f32.gmra.mrb[0].mxu0 %v1001
      %v1132 = vpop.f32.mrb[0].mxu0
      %v1133 = vadd.f32 %v976, %v1132
      %v1134 = vpop.f32.mrb[0].mxu0
      %1135 = vmatprep.mubr.f32.mxu0 0.0
      %1136 = vmatmul.mubr.f32.gmra.mrb[0].mxu0 %v1004
      %v1137 = vpop.f32.mrb[0].mxu0
      %v1138 = vadd.f32 %v976, %v1137
      %v1139 = vpop.f32.mrb[0].mxu0
      %1140 = vmatprep.mubr.f32.mxu0 0.0
      %1141 = vmatmul.mubr.f32.gmra.mrb[0].mxu0 %v1007
      %v1142 = vpop.f32.mrb[0].mxu0
      %v1143 = vadd.f32 %v976, %v1142
      %v1144 = vpop.f32.mrb[0].mxu0
      %1145 = vmatprep.mubr.f32.mxu0 0.0
      %1146 = vmatmul.mubr.f32.gmra.mrb[0].mxu0 %v1010
      %v1147 = vpop.f32.mrb[0].mxu0
      %v1148 = vadd.f32 %v976, %v1147
      %v1149 = vpop.f32.mrb[0].mxu0
      %1150 = vmatprep.mubr.f32.mxu0 0.0
      %1151 = vmatmul.mubr.f32.gmra.mrb[0].mxu0 %v1013
      %v1152 = vpop.f32.mrb[0].mxu0
      %v1153 = vadd.f32 %v976, %v1152
      %v1154 = vpop.f32.mrb[0].mxu0
      %1155 = vmatprep.mubr.f32.mxu0 0.0
      %1156 = vmatmul.mubr.f32.gmra.mrb[0].mxu0 %v1016
      %v1157 = vpop.f32.mrb[0].mxu0
      %v1158 = vadd.f32 %v976, %v1157
      %v1159 = vpop.f32.mrb[0].mxu0
      %1160 = vmatprep.mubr.f32.mxu0 0.0
      %1161 = vmatmul.mubr.f32.gmra.mrb[0].mxu0 %v1019
      %v1162 = vpop.f32.mrb[0].mxu0
      %v1163 = vadd.f32 %v976, %v1162
      %v1164 = vpop.f32.mrb[0].mxu0
      %1165 = vmatprep.mubr.f32.mxu0 0.0
      %1166 = vmatmul.mubr.f32.gmra.mrb[0].mxu0 %v1022
      %v1167 = vpop.f32.mrb[0].mxu0
      %v1168 = vadd.f32 %v976, %v1167
      %v1169 = vpop.f32.mrb[0].mxu0
      %1170 = vmatprep.mubr.f32.mxu0 0.0
      %1171 = vmatmul.mubr.f32.gmra.mrb[0].mxu0 %v1025
      %v1172 = vpop.f32.mrb[0].mxu0
      %v1173 = vadd.f32 %v976, %v1172
      %v1174 = vpop.f32.mrb[0].mxu0
      %1175 = vdwg.mxu0
      %vm1176 = vcmp.ge.f32.partialorder %v1098, 0.0
      %vm1177 = vcmp.ge.f32.partialorder %v1103, 0.0
      %vm1178 = vcmp.ge.f32.partialorder %v1108, 0.0
      %vm1179 = vcmp.ge.f32.partialorder %v1113, 0.0
      %vm1180 = vcmp.ge.f32.partialorder %v1118, 0.0
      %vm1181 = vcmp.ge.f32.partialorder %v1123, 0.0
      %vm1182 = vcmp.ge.f32.partialorder %v1128, 0.0
      %vm1183 = vcmp.ge.f32.partialorder %v1133, 0.0
      %vm1184 = vcmp.ge.f32.partialorder %v1138, 0.0
      %vm1185 = vcmp.ge.f32.partialorder %v1143, 0.0
      %vm1186 = vcmp.ge.f32.partialorder %v1148, 0.0
      %vm1187 = vcmp.ge.f32.partialorder %v1153, 0.0
      %vm1188 = vcmp.ge.f32.partialorder %v1158, 0.0
      %vm1189 = vcmp.ge.f32.partialorder %v1163, 0.0
      %vm1190 = vcmp.ge.f32.partialorder %v1168, 0.0
      %vm1191 = vcmp.ge.f32.partialorder %v1173, 0.0
      %v1192 = vmul.f32 %v1098, 0.01
      %v1193 = vmul.f32 %v1103, 0.01
      %v1194 = vmul.f32 %v1108, 0.01
      %v1195 = vmul.f32 %v1113, 0.01
      %v1196 = vmul.f32 %v1118, 0.01
      %v1197 = vmul.f32 %v1123, 0.01
      %v1198 = vmul.f32 %v1128, 0.01
      %v1199 = vmul.f32 %v1133, 0.01
      %v1200 = vmul.f32 %v1138, 0.01
      %v1201 = vmul.f32 %v1143, 0.01
      %v1202 = vmul.f32 %v1148, 0.01
      %v1203 = vmul.f32 %v1153, 0.01
      %v1204 = vmul.f32 %v1158, 0.01
      %v1205 = vmul.f32 %v1163, 0.01
      %v1206 = vmul.f32 %v1168, 0.01
      %v1207 = vmul.f32 %v1173, 0.01
      %v1208 = vsel %vm1176, %v1098, %v1192
      %v1209 = vsel %vm1177, %v1103, %v1193
      %v1210 = vsel %vm1178, %v1108, %v1194
      %v1211 = vsel %vm1179, %v1113, %v1195
      %v1212 = vsel %vm1180, %v1118, %v1196
      %v1213 = vsel %vm1181, %v1123, %v1197
      %v1214 = vsel %vm1182, %v1128, %v1198
      %v1215 = vsel %vm1183, %v1133, %v1199
      %v1216 = vsel %vm1184, %v1138, %v1200
      %v1217 = vsel %vm1185, %v1143, %v1201
      %v1218 = vsel %vm1186, %v1148, %v1202
      %v1219 = vsel %vm1187, %v1153, %v1203
      %v1220 = vsel %vm1188, %v1158, %v1204
      %v1221 = vsel %vm1189, %v1163, %v1205
      %v1222 = vsel %vm1190, %v1168, %v1206
      %v1223 = vsel %vm1191, %v1173, %v1207
      %1224 = vrot.lane.b32.xlu0 %v436, 4
      %v1225 = vpop.permute.xlu0 %1224
      %1226 = vrot.lane.b32.xlu0 %v439, 4
      %v1227 = vpop.permute.xlu0 %1226
      %1228 = vrot.lane.b32.xlu0 %v442, 4
      %v1229 = vpop.permute.xlu0 %1228
      %1230 = vrot.lane.b32.xlu0 %v445, 4
      %v1231 = vpop.permute.xlu0 %1230
      %1232 = vrot.lane.b32.xlu0 %v448, 4
      %v1233 = vpop.permute.xlu0 %1232
      %1234 = vrot.lane.b32.xlu0 %v451, 4
      %v1235 = vpop.permute.xlu0 %1234
      %1236 = vrot.lane.b32.xlu0 %v454, 4
      %v1237 = vpop.permute.xlu0 %1236
      %1238 = vrot.lane.b32.xlu0 %v457, 4
      %v1239 = vpop.permute.xlu0 %1238
      %1240 = vrot.lane.b32.xlu0 %v460, 4
      %v1241 = vpop.permute.xlu0 %1240
      %1242 = vrot.lane.b32.xlu0 %v463, 4
      %v1243 = vpop.permute.xlu0 %1242
      %1244 = vrot.lane.b32.xlu0 %v466, 4
      %v1245 = vpop.permute.xlu0 %1244
      %1246 = vrot.lane.b32.xlu0 %v469, 4
      %v1247 = vpop.permute.xlu0 %1246
      %1248 = vrot.lane.b32.xlu0 %v472, 4
      %v1249 = vpop.permute.xlu0 %1248
      %1250 = vrot.lane.b32.xlu0 %v475, 4
      %v1251 = vpop.permute.xlu0 %1250
      %1252 = vrot.lane.b32.xlu0 %v478, 4
      %v1253 = vpop.permute.xlu0 %1252
      %1254 = vrot.lane.b32.xlu0 %v481, 4
      %v1255 = vpop.permute.xlu0 %1254
      %v1288 = vrot.slane %v301, 1
      %v1289 = vrot.slane %v302, 1
      %v1290 = vsel %vm433, %v1288, %v1289
      %v1291 = vrot.slane %v303, 1
      %v1292 = vrot.slane %v304, 1
      %v1293 = vsel %vm433, %v1291, %v1292
      %v1294 = vrot.slane %v305, 1
      %v1295 = vrot.slane %v306, 1
      %v1296 = vsel %vm433, %v1294, %v1295
      %v1297 = vrot.slane %v307, 1
      %v1298 = vrot.slane %v308, 1
      %v1299 = vsel %vm433, %v1297, %v1298
      %v1300 = vrot.slane %v309, 1
      %v1301 = vrot.slane %v310, 1
      %v1302 = vsel %vm433, %v1300, %v1301
      %v1303 = vrot.slane %v311, 1
      %v1304 = vrot.slane %v312, 1
      %v1305 = vsel %vm433, %v1303, %v1304
      %v1306 = vrot.slane %v313, 1
      %v1307 = vrot.slane %v314, 1
      %v1308 = vsel %vm433, %v1306, %v1307
      %v1309 = vrot.slane %v315, 1
      %v1310 = vrot.slane %v316, 1
      %v1311 = vsel %vm433, %v1309, %v1310
      %v1312 = vrot.slane %v317, 1
      %v1313 = vrot.slane %v318, 1
      %v1314 = vsel %vm433, %v1312, %v1313
      %v1315 = vrot.slane %v319, 1
      %v1316 = vrot.slane %v320, 1
      %v1317 = vsel %vm433, %v1315, %v1316
      %v1318 = vrot.slane %v321, 1
      %v1319 = vrot.slane %v322, 1
      %v1320 = vsel %vm433, %v1318, %v1319
      %v1321 = vrot.slane %v323, 1
      %v1322 = vrot.slane %v324, 1
      %v1323 = vsel %vm433, %v1321, %v1322
      %v1324 = vrot.slane %v325, 1
      %v1325 = vrot.slane %v326, 1
      %v1326 = vsel %vm433, %v1324, %v1325
      %v1327 = vrot.slane %v327, 1
      %v1328 = vrot.slane %v328, 1
      %v1329 = vsel %vm433, %v1327, %v1328
      %v1330 = vrot.slane %v329, 1
      %v1331 = vrot.slane %v330, 1
      %v1332 = vsel %vm433, %v1330, %v1331
      %v1333 = vrot.slane %v331, 1
      %v1334 = vrot.slane %v332, 1
      %v1335 = vsel %vm433, %v1333, %v1334
      %1336 = vrot.lane.b32.xlu0 %v1290, 8
      %v1337 = vpop.permute.xlu0 %1336
      %1338 = vrot.lane.b32.xlu0 %v1293, 8
      %v1339 = vpop.permute.xlu0 %1338
      %1340 = vrot.lane.b32.xlu0 %v1296, 8
      %v1341 = vpop.permute.xlu0 %1340
      %1342 = vrot.lane.b32.xlu0 %v1299, 8
      %v1343 = vpop.permute.xlu0 %1342
      %1344 = vrot.lane.b32.xlu0 %v1302, 8
      %v1345 = vpop.permute.xlu0 %1344
      %1346 = vrot.lane.b32.xlu0 %v1305, 8
      %v1347 = vpop.permute.xlu0 %1346
      %1348 = vrot.lane.b32.xlu0 %v1308, 8
      %v1349 = vpop.permute.xlu0 %1348
      %1350 = vrot.lane.b32.xlu0 %v1311, 8
      %v1351 = vpop.permute.xlu0 %1350
      %1352 = vrot.lane.b32.xlu0 %v1314, 8
      %v1353 = vpop.permute.xlu0 %1352
      %1354 = vrot.lane.b32.xlu0 %v1317, 8
      %v1355 = vpop.permute.xlu0 %1354
      %1356 = vrot.lane.b32.xlu0 %v1320, 8
      %v1357 = vpop.permute.xlu0 %1356
      %1358 = vrot.lane.b32.xlu0 %v1323, 8
      %v1359 = vpop.permute.xlu0 %1358
      %1360 = vrot.lane.b32.xlu0 %v1326, 8
      %v1361 = vpop.permute.xlu0 %1360
      %1362 = vrot.lane.b32.xlu0 %v1329, 8
      %v1363 = vpop.permute.xlu0 %1362
      %1364 = vrot.lane.b32.xlu0 %v1332, 8
      %v1365 = vpop.permute.xlu0 %1364
      %1366 = vrot.lane.b32.xlu0 %v1335, 8
      %v1367 = vpop.permute.xlu0 %1366
      %1384 = vrot.lane.b32.xlu0 %v303, 12
      %v1385 = vpop.permute.xlu0 %1384
      %1386 = vrot.lane.b32.xlu0 %v305, 12
      %v1387 = vpop.permute.xlu0 %1386
      %1388 = vrot.lane.b32.xlu0 %v307, 12
      %v1389 = vpop.permute.xlu0 %1388
      %1390 = vrot.lane.b32.xlu0 %v309, 12
      %v1391 = vpop.permute.xlu0 %1390
      %1392 = vrot.lane.b32.xlu0 %v311, 12
      %v1393 = vpop.permute.xlu0 %1392
      %1394 = vrot.lane.b32.xlu0 %v313, 12
      %v1395 = vpop.permute.xlu0 %1394
      %1396 = vrot.lane.b32.xlu0 %v315, 12
      %v1397 = vpop.permute.xlu0 %1396
      %1398 = vrot.lane.b32.xlu0 %v317, 12
      %v1399 = vpop.permute.xlu0 %1398
      %1400 = vrot.lane.b32.xlu0 %v319, 12
      %v1401 = vpop.permute.xlu0 %1400
      %1402 = vrot.lane.b32.xlu0 %v321, 12
      %v1403 = vpop.permute.xlu0 %1402
      %1404 = vrot.lane.b32.xlu0 %v323, 12
      %v1405 = vpop.permute.xlu0 %1404
      %1406 = vrot.lane.b32.xlu0 %v325, 12
      %v1407 = vpop.permute.xlu0 %1406
      %1408 = vrot.lane.b32.xlu0 %v327, 12
      %v1409 = vpop.permute.xlu0 %1408
      %1410 = vrot.lane.b32.xlu0 %v329, 12
      %v1411 = vpop.permute.xlu0 %1410
      %1412 = vrot.lane.b32.xlu0 %v331, 12
      %v1413 = vpop.permute.xlu0 %1412
      %1414 = vrot.lane.b32.xlu0 %v333, 12
      %v1415 = vpop.permute.xlu0 %1414
      %1432 = vrot.lane.b32.xlu0 %v439, 16
      %v1433 = vpop.permute.xlu0 %1432
      %1434 = vrot.lane.b32.xlu0 %v442, 16
      %v1435 = vpop.permute.xlu0 %1434
      %1436 = vrot.lane.b32.xlu0 %v445, 16
      %v1437 = vpop.permute.xlu0 %1436
      %1438 = vrot.lane.b32.xlu0 %v448, 16
      %v1439 = vpop.permute.xlu0 %1438
      %1440 = vrot.lane.b32.xlu0 %v451, 16
      %v1441 = vpop.permute.xlu0 %1440
      %1442 = vrot.lane.b32.xlu0 %v454, 16
      %v1443 = vpop.permute.xlu0 %1442
      %1444 = vrot.lane.b32.xlu0 %v457, 16
      %v1445 = vpop.permute.xlu0 %1444
      %1446 = vrot.lane.b32.xlu0 %v460, 16
      %v1447 = vpop.permute.xlu0 %1446
      %1448 = vrot.lane.b32.xlu0 %v463, 16
      %v1449 = vpop.permute.xlu0 %1448
      %1450 = vrot.lane.b32.xlu0 %v466, 16
      %v1451 = vpop.permute.xlu0 %1450
      %1452 = vrot.lane.b32.xlu0 %v469, 16
      %v1453 = vpop.permute.xlu0 %1452
      %1454 = vrot.lane.b32.xlu0 %v472, 16
      %v1455 = vpop.permute.xlu0 %1454
      %1456 = vrot.lane.b32.xlu0 %v475, 16
      %v1457 = vpop.permute.xlu0 %1456
      %1458 = vrot.lane.b32.xlu0 %v478, 16
      %v1459 = vpop.permute.xlu0 %1458
      %1460 = vrot.lane.b32.xlu0 %v481, 16
      %v1461 = vpop.permute.xlu0 %1460
      %1462 = vrot.lane.b32.xlu0 %v631, 16
      %v1463 = vpop.permute.xlu0 %1462
      %v1481 = vrot.slane %v333, 1
      %v1482 = vrot.slane %v334, 1
      %v1483 = vsel %vm433, %v1481, %v1482
      %1484 = vrot.lane.b32.xlu0 %v1293, 20
      %v1485 = vpop.permute.xlu0 %1484
      %1486 = vrot.lane.b32.xlu0 %v1296, 20
      %v1487 = vpop.permute.xlu0 %1486
      %1488 = vrot.lane.b32.xlu0 %v1299, 20
      %v1489 = vpop.permute.xlu0 %1488
      %1490 = vrot.lane.b32.xlu0 %v1302, 20
      %v1491 = vpop.permute.xlu0 %1490
      %1492 = vrot.lane.b32.xlu0 %v1305, 20
      %v1493 = vpop.permute.xlu0 %1492
      %1494 = vrot.lane.b32.xlu0 %v1308, 20
      %v1495 = vpop.permute.xlu0 %1494
      %1496 = vrot.lane.b32.xlu0 %v1311, 20
      %v1497 = vpop.permute.xlu0 %1496
      %1498 = vrot.lane.b32.xlu0 %v1314, 20
      %v1499 = vpop.permute.xlu0 %1498
      %1500 = vrot.lane.b32.xlu0 %v1317, 20
      %v1501 = vpop.permute.xlu0 %1500
      %1502 = vrot.lane.b32.xlu0 %v1320, 20
      %v1503 = vpop.permute.xlu0 %1502
      %1504 = vrot.lane.b32.xlu0 %v1323, 20
      %v1505 = vpop.permute.xlu0 %1504
      %1506 = vrot.lane.b32.xlu0 %v1326, 20
      %v1507 = vpop.permute.xlu0 %1506
      %1508 = vrot.lane.b32.xlu0 %v1329, 20
      %v1509 = vpop.permute.xlu0 %1508
      %1510 = vrot.lane.b32.xlu0 %v1332, 20
      %v1511 = vpop.permute.xlu0 %1510
      %1512 = vrot.lane.b32.xlu0 %v1335, 20
      %v1513 = vpop.permute.xlu0 %1512
      %1514 = vrot.lane.b32.xlu0 %v1483, 20
      %v1515 = vpop.permute.xlu0 %1514
      %1532 = vrot.lane.b32.xlu0 %v305, 24
      %v1533 = vpop.permute.xlu0 %1532
      %1534 = vrot.lane.b32.xlu0 %v307, 24
      %v1535 = vpop.permute.xlu0 %1534
      %1536 = vrot.lane.b32.xlu0 %v309, 24
      %v1537 = vpop.permute.xlu0 %1536
      %1538 = vrot.lane.b32.xlu0 %v311, 24
      %v1539 = vpop.permute.xlu0 %1538
      %1540 = vrot.lane.b32.xlu0 %v313, 24
      %v1541 = vpop.permute.xlu0 %1540
      %1542 = vrot.lane.b32.xlu0 %v315, 24
      %v1543 = vpop.permute.xlu0 %1542
      %1544 = vrot.lane.b32.xlu0 %v317, 24
      %v1545 = vpop.permute.xlu0 %1544
      %1546 = vrot.lane.b32.xlu0 %v319, 24
      %v1547 = vpop.permute.xlu0 %1546
      %1548 = vrot.lane.b32.xlu0 %v321, 24
      %v1549 = vpop.permute.xlu0 %1548
      %1550 = vrot.lane.b32.xlu0 %v323, 24
      %v1551 = vpop.permute.xlu0 %1550
      %1552 = vrot.lane.b32.xlu0 %v325, 24
      %v1553 = vpop.permute.xlu0 %1552
      %1554 = vrot.lane.b32.xlu0 %v327, 24
      %v1555 = vpop.permute.xlu0 %1554
      %1556 = vrot.lane.b32.xlu0 %v329, 24
      %v1557 = vpop.permute.xlu0 %1556
      %1558 = vrot.lane.b32.xlu0 %v331, 24
      %v1559 = vpop.permute.xlu0 %1558
      %1560 = vrot.lane.b32.xlu0 %v333, 24
      %v1561 = vpop.permute.xlu0 %1560
      %1562 = vrot.lane.b32.xlu0 %v335, 24
      %v1563 = vpop.permute.xlu0 %1562
      %1580 = vrot.lane.b32.xlu0 %v442, 28
      %v1581 = vpop.permute.xlu0 %1580
      %1582 = vrot.lane.b32.xlu0 %v445, 28
      %v1583 = vpop.permute.xlu0 %1582
      %1584 = vrot.lane.b32.xlu0 %v448, 28
      %v1585 = vpop.permute.xlu0 %1584
      %1586 = vrot.lane.b32.xlu0 %v451, 28
      %v1587 = vpop.permute.xlu0 %1586
      %1588 = vrot.lane.b32.xlu0 %v454, 28
      %v1589 = vpop.permute.xlu0 %1588
      %1590 = vrot.lane.b32.xlu0 %v457, 28
      %v1591 = vpop.permute.xlu0 %1590
      %1592 = vrot.lane.b32.xlu0 %v460, 28
      %v1593 = vpop.permute.xlu0 %1592
      %1594 = vrot.lane.b32.xlu0 %v463, 28
      %v1595 = vpop.permute.xlu0 %1594
      %1596 = vrot.lane.b32.xlu0 %v466, 28
      %v1597 = vpop.permute.xlu0 %1596
      %1598 = vrot.lane.b32.xlu0 %v469, 28
      %v1599 = vpop.permute.xlu0 %1598
      %1600 = vrot.lane.b32.xlu0 %v472, 28
      %v1601 = vpop.permute.xlu0 %1600
      %1602 = vrot.lane.b32.xlu0 %v475, 28
      %v1603 = vpop.permute.xlu0 %1602
      %1604 = vrot.lane.b32.xlu0 %v478, 28
      %v1605 = vpop.permute.xlu0 %1604
      %1606 = vrot.lane.b32.xlu0 %v481, 28
      %v1607 = vpop.permute.xlu0 %1606
      %1608 = vrot.lane.b32.xlu0 %v631, 28
      %v1609 = vpop.permute.xlu0 %1608
      %1610 = vrot.lane.b32.xlu0 %v781, 28
      %v1611 = vpop.permute.xlu0 %1610
      %v1629 = vrot.slane %v335, 1
      %v1630 = vrot.slane %v336, 1
      %v1631 = vsel %vm433, %v1629, %v1630
      %1632 = vrot.lane.b32.xlu0 %v1296, 32
      %v1633 = vpop.permute.xlu0 %1632
      %1634 = vrot.lane.b32.xlu0 %v1299, 32
      %v1635 = vpop.permute.xlu0 %1634
      %1636 = vrot.lane.b32.xlu0 %v1302, 32
      %v1637 = vpop.permute.xlu0 %1636
      %1638 = vrot.lane.b32.xlu0 %v1305, 32
      %v1639 = vpop.permute.xlu0 %1638
      %1640 = vrot.lane.b32.xlu0 %v1308, 32
      %v1641 = vpop.permute.xlu0 %1640
      %1642 = vrot.lane.b32.xlu0 %v1311, 32
      %v1643 = vpop.permute.xlu0 %1642
      %1644 = vrot.lane.b32.xlu0 %v1314, 32
      %v1645 = vpop.permute.xlu0 %1644
      %1646 = vrot.lane.b32.xlu0 %v1317, 32
      %v1647 = vpop.permute.xlu0 %1646
      %1648 = vrot.lane.b32.xlu0 %v1320, 32
      %v1649 = vpop.permute.xlu0 %1648
      %1650 = vrot.lane.b32.xlu0 %v1323, 32
      %v1651 = vpop.permute.xlu0 %1650
      %1652 = vrot.lane.b32.xlu0 %v1326, 32
      %v1653 = vpop.permute.xlu0 %1652
      %1654 = vrot.lane.b32.xlu0 %v1329, 32
      %v1655 = vpop.permute.xlu0 %1654
      %1656 = vrot.lane.b32.xlu0 %v1332, 32
      %v1657 = vpop.permute.xlu0 %1656
      %1658 = vrot.lane.b32.xlu0 %v1335, 32
      %v1659 = vpop.permute.xlu0 %1658
      %1660 = vrot.lane.b32.xlu0 %v1483, 32
      %v1661 = vpop.permute.xlu0 %1660
      %1662 = vrot.lane.b32.xlu0 %v1631, 32
      %v1663 = vpop.permute.xlu0 %1662
      %v1680 = vsel %vm830, %v301, %v1225
      %v1681 = vsel %vm830, %v303, %v1227
      %v1682 = vsel %vm830, %v305, %v1229
      %v1683 = vsel %vm830, %v307, %v1231
      %v1684 = vsel %vm830, %v309, %v1233
      %v1685 = vsel %vm830, %v311, %v1235
      %v1686 = vsel %vm830, %v313, %v1237
      %v1687 = vsel %vm830, %v315, %v1239
      %v1688 = vsel %vm830, %v317, %v1241
      %v1689 = vsel %vm830, %v319, %v1243
      %v1690 = vsel %vm830, %v321, %v1245
      %v1691 = vsel %vm830, %v323, %v1247
      %v1692 = vsel %vm830, %v325, %v1249
      %v1693 = vsel %vm830, %v327, %v1251
      %v1694 = vsel %vm830, %v329, %v1253
      %v1695 = vsel %vm830, %v331, %v1255
      %v1696 = vsel %vm847, %v1680, %v1337
      %v1697 = vsel %vm847, %v1681, %v1339
      %v1698 = vsel %vm847, %v1682, %v1341
      %v1699 = vsel %vm847, %v1683, %v1343
      %v1700 = vsel %vm847, %v1684, %v1345
      %v1701 = vsel %vm847, %v1685, %v1347
      %v1702 = vsel %vm847, %v1686, %v1349
      %v1703 = vsel %vm847, %v1687, %v1351
      %v1704 = vsel %vm847, %v1688, %v1353
      %v1705 = vsel %vm847, %v1689, %v1355
      %v1706 = vsel %vm847, %v1690, %v1357
      %v1707 = vsel %vm847, %v1691, %v1359
      %v1708 = vsel %vm847, %v1692, %v1361
      %v1709 = vsel %vm847, %v1693, %v1363
      %v1710 = vsel %vm847, %v1694, %v1365
      %v1711 = vsel %vm847, %v1695, %v1367
      %v1712 = vsel %vm864, %v1696, %v1385
      %v1713 = vsel %vm864, %v1697, %v1387
      %v1714 = vsel %vm864, %v1698, %v1389
      %v1715 = vsel %vm864, %v1699, %v1391
      %v1716 = vsel %vm864, %v1700, %v1393
      %v1717 = vsel %vm864, %v1701, %v1395
      %v1718 = vsel %vm864, %v1702, %v1397
      %v1719 = vsel %vm864, %v1703, %v1399
      %v1720 = vsel %vm864, %v1704, %v1401
      %v1721 = vsel %vm864, %v1705, %v1403
      %v1722 = vsel %vm864, %v1706, %v1405
      %v1723 = vsel %vm864, %v1707, %v1407
      %v1724 = vsel %vm864, %v1708, %v1409
      %v1725 = vsel %vm864, %v1709, %v1411
      %v1726 = vsel %vm864, %v1710, %v1413
      %v1727 = vsel %vm864, %v1711, %v1415
      %v1728 = vsel %vm881, %v1712, %v1433
      %v1729 = vsel %vm881, %v1713, %v1435
      %v1730 = vsel %vm881, %v1714, %v1437
      %v1731 = vsel %vm881, %v1715, %v1439
      %v1732 = vsel %vm881, %v1716, %v1441
      %v1733 = vsel %vm881, %v1717, %v1443
      %v1734 = vsel %vm881, %v1718, %v1445
      %v1735 = vsel %vm881, %v1719, %v1447
      %v1736 = vsel %vm881, %v1720, %v1449
      %v1737 = vsel %vm881, %v1721, %v1451
      %v1738 = vsel %vm881, %v1722, %v1453
      %v1739 = vsel %vm881, %v1723, %v1455
      %v1740 = vsel %vm881, %v1724, %v1457
      %v1741 = vsel %vm881, %v1725, %v1459
      %v1742 = vsel %vm881, %v1726, %v1461
      %v1743 = vsel %vm881, %v1727, %v1463
      %v1744 = vsel %vm898, %v1728, %v1485
      %v1745 = vsel %vm898, %v1729, %v1487
      %v1746 = vsel %vm898, %v1730, %v1489
      %v1747 = vsel %vm898, %v1731, %v1491
      %v1748 = vsel %vm898, %v1732, %v1493
      %v1749 = vsel %vm898, %v1733, %v1495
      %v1750 = vsel %vm898, %v1734, %v1497
      %v1751 = vsel %vm898, %v1735, %v1499
      %v1752 = vsel %vm898, %v1736, %v1501
      %v1753 = vsel %vm898, %v1737, %v1503
      %v1754 = vsel %vm898, %v1738, %v1505
      %v1755 = vsel %vm898, %v1739, %v1507
      %v1756 = vsel %vm898, %v1740, %v1509
      %v1757 = vsel %vm898, %v1741, %v1511
      %v1758 = vsel %vm898, %v1742, %v1513
      %v1759 = vsel %vm898, %v1743, %v1515
      %v1760 = vsel %vm915, %v1744, %v1533
      %v1761 = vsel %vm915, %v1745, %v1535
      %v1762 = vsel %vm915, %v1746, %v1537
      %v1763 = vsel %vm915, %v1747, %v1539
      %v1764 = vsel %vm915, %v1748, %v1541
      %v1765 = vsel %vm915, %v1749, %v1543
      %v1766 = vsel %vm915, %v1750, %v1545
      %v1767 = vsel %vm915, %v1751, %v1547
      %v1768 = vsel %vm915, %v1752, %v1549
      %v1769 = vsel %vm915, %v1753, %v1551
      %v1770 = vsel %vm915, %v1754, %v1553
      %v1771 = vsel %vm915, %v1755, %v1555
      %v1772 = vsel %vm915, %v1756, %v1557
      %v1773 = vsel %vm915, %v1757, %v1559
      %v1774 = vsel %vm915, %v1758, %v1561
      %v1775 = vsel %vm915, %v1759, %v1563
      %v1776 = vsel %vm932, %v1760, %v1581
      %v1777 = vsel %vm932, %v1761, %v1583
      %v1778 = vsel %vm932, %v1762, %v1585
      %v1779 = vsel %vm932, %v1763, %v1587
      %v1780 = vsel %vm932, %v1764, %v1589
      %v1781 = vsel %vm932, %v1765, %v1591
      %v1782 = vsel %vm932, %v1766, %v1593
      %v1783 = vsel %vm932, %v1767, %v1595
      %v1784 = vsel %vm932, %v1768, %v1597
      %v1785 = vsel %vm932, %v1769, %v1599
      %v1786 = vsel %vm932, %v1770, %v1601
      %v1787 = vsel %vm932, %v1771, %v1603
      %v1788 = vsel %vm932, %v1772, %v1605
      %v1789 = vsel %vm932, %v1773, %v1607
      %v1790 = vsel %vm932, %v1774, %v1609
      %v1791 = vsel %vm932, %v1775, %v1611
      %v1792 = vsel %vm949, %v1776, %v1633
      %v1793 = vsel %vm949, %v1777, %v1635
      %v1794 = vsel %vm949, %v1778, %v1637
      %v1795 = vsel %vm949, %v1779, %v1639
      %v1796 = vsel %vm949, %v1780, %v1641
      %v1797 = vsel %vm949, %v1781, %v1643
      %v1798 = vsel %vm949, %v1782, %v1645
      %v1799 = vsel %vm949, %v1783, %v1647
      %v1800 = vsel %vm949, %v1784, %v1649
      %v1801 = vsel %vm949, %v1785, %v1651
      %v1802 = vsel %vm949, %v1786, %v1653
      %v1803 = vsel %vm949, %v1787, %v1655
      %v1804 = vsel %vm949, %v1788, %v1657
      %v1805 = vsel %vm949, %v1789, %v1659
      %v1806 = vsel %vm949, %v1790, %v1661
      %v1807 = vsel %vm949, %v1791, %v1663
      %v1809 = vsel %vm978, %v1792, 0
      %v1812 = vsel %vm978, %v1793, 0
      %v1815 = vsel %vm978, %v1794, 0
      %v1818 = vsel %vm978, %v1795, 0
      %v1821 = vsel %vm978, %v1796, 0
      %v1824 = vsel %vm978, %v1797, 0
      %v1827 = vsel %vm978, %v1798, 0
      %v1830 = vsel %vm978, %v1799, 0
      %v1833 = vsel %vm978, %v1800, 0
      %v1836 = vsel %vm978, %v1801, 0
      %v1839 = vsel %vm978, %v1802, 0
      %v1842 = vsel %vm978, %v1803, 0
      %v1845 = vsel %vm978, %v1804, 0
      %v1848 = vsel %vm978, %v1805, 0
      %v1851 = vsel %vm978, %v1806, 0
      %v1854 = vsel %vm978, %v1807, 0
      %1856 = vmatprep.subr.mxu0 0.0
      %1857 = vmatpush1.msra.mxu0 %v966
      %1858 = vmatprep.subr.mxu0 0.0
      %1859 = vmatpush1.msra.mxu0 %v967
      %1860 = vmatprep.subr.mxu0 0.0
      %1861 = vmatpush1.msra.mxu0 %v968
      %1862 = vmatprep.subr.mxu0 0.0
      %1863 = vmatpush1.msra.mxu0 %v969
      %1864 = vmatprep.subr.mxu0 0.0
      %1865 = vmatpush1.msra.mxu0 %v1029
      %1866 = vmatprep.subr.mxu0 0.0
      %1867 = vmatpush1.msra.mxu0 0.0
      %1868 = vmatprep.subr.mxu0 0.0
      %1869 = vmatpush1.msra.mxu0 0.0
      %1870 = vmatprep.subr.mxu0 0.0
      %1871 = vmatpush1.msra.mxu0 0.0
      %1872 = vmatprep.subr.mxu0 0.0
      %1873 = vmatpush1.msra.mxu0 0.0
      %1874 = vmatprep.subr.mxu0 0.0
      %1875 = vmatpush1.msra.mxu0 0.0
      %1876 = vmatprep.subr.mxu0 0.0
      %1877 = vmatpush1.msra.mxu0 0.0
      %1878 = vmatprep.subr.mxu0 0.0
      %1879 = vmatpush1.msra.mxu0 0.0
      %1880 = vmatprep.subr.mxu0 0.0
      %1881 = vmatpush1.msra.mxu0 0.0
      %1882 = vmatprep.subr.mxu0 0.0
      %1883 = vmatpush1.msra.mxu0 0.0
      %1884 = vmatprep.subr.mxu0 0.0
      %1885 = vmatpush1.msra.mxu0 0.0
      %1886 = vmatprep.subr.mxu0 0.0
      %1887 = vmatpush1.msra.mxu0 0.0
      %1888 = vmatprep.subr.mxu0 0.0
      %1889 = vmatpush1.msra.mxu0 0.0
      %1890 = vmatprep.subr.mxu0 0.0
      %1891 = vmatpush1.msra.mxu0 0.0
      %1892 = vmatprep.subr.mxu0 0.0
      %1893 = vmatpush1.msra.mxu0 0.0
      %1894 = vmatprep.subr.mxu0 0.0
      %1895 = vmatpush1.msra.mxu0 0.0
      %1896 = vmatprep.subr.mxu0 0.0
      %1897 = vmatpush1.msra.mxu0 0.0
      %1898 = vmatprep.subr.mxu0 0.0
      %1899 = vmatpush1.msra.mxu0 0.0
      %1900 = vmatprep.subr.mxu0 0.0
      %1901 = vmatpush1.msra.mxu0 0.0
      %1902 = vmatprep.subr.mxu0 0.0
      %1903 = vmatpush1.msra.mxu0 0.0
      %1904 = vmatprep.subr.mxu0 0.0
      %1905 = vmatpush1.msra.mxu0 0.0
      %1906 = vmatprep.subr.mxu0 0.0
      %1907 = vmatpush1.msra.mxu0 0.0
      %1908 = vmatprep.subr.mxu0 0.0
      %1909 = vmatpush1.msra.mxu0 0.0
      %1910 = vmatprep.subr.mxu0 0.0
      %1911 = vmatpush1.msra.mxu0 0.0
      %1912 = vmatprep.subr.mxu0 0.0
      %1913 = vmatpush1.msra.mxu0 0.0
      %1914 = vmatprep.subr.mxu0 0.0
      %1915 = vmatpush1.msra.mxu0 0.0
      %1916 = vmatprep.subr.mxu0 0.0
      %1917 = vmatpush1.msra.mxu0 0.0
      %1918 = vmatprep.subr.mxu0 0.0
      %1919 = vmatpush1.msra.mxu0 0.0
      %1920 = vmatprep.mubr.f32.mxu0 0.0
      %1921 = vmatmul.mubr.f32.gmra.mrb[0].mxu0 %v1809
      %v1922 = vpop.f32.mrb[0].mxu0
      %v1923 = vadd.f32 %v976, %v1922
      %v1924 = vpop.f32.mrb[0].mxu0
      %1925 = vmatprep.mubr.f32.mxu0 0.0
      %1926 = vmatmul.mubr.f32.gmra.mrb[0].mxu0 %v1812
      %v1927 = vpop.f32.mrb[0].mxu0
      %v1928 = vadd.f32 %v976, %v1927
      %v1929 = vpop.f32.mrb[0].mxu0
      %1930 = vmatprep.mubr.f32.mxu0 0.0
      %1931 = vmatmul.mubr.f32.gmra.mrb[0].mxu0 %v1815
      %v1932 = vpop.f32.mrb[0].mxu0
      %v1933 = vadd.f32 %v976, %v1932
      %v1934 = vpop.f32.mrb[0].mxu0
      %1935 = vmatprep.mubr.f32.mxu0 0.0
      %1936 = vmatmul.mubr.f32.gmra.mrb[0].mxu0 %v1818
      %v1937 = vpop.f32.mrb[0].mxu0
      %v1938 = vadd.f32 %v976, %v1937
      %v1939 = vpop.f32.mrb[0].mxu0
      %1940 = vmatprep.mubr.f32.mxu0 0.0
      %1941 = vmatmul.mubr.f32.gmra.mrb[0].mxu0 %v1821
      %v1942 = vpop.f32.mrb[0].mxu0
      %v1943 = vadd.f32 %v976, %v1942
      %v1944 = vpop.f32.mrb[0].mxu0
      %1945 = vmatprep.mubr.f32.mxu0 0.0
      %1946 = vmatmul.mubr.f32.gmra.mrb[0].mxu0 %v1824
      %v1947 = vpop.f32.mrb[0].mxu0
      %v1948 = vadd.f32 %v976, %v1947
      %v1949 = vpop.f32.mrb[0].mxu0
      %1950 = vmatprep.mubr.f32.mxu0 0.0
      %1951 = vmatmul.mubr.f32.gmra.mrb[0].mxu0 %v1827
      %v1952 = vpop.f32.mrb[0].mxu0
      %v1953 = vadd.f32 %v976, %v1952
      %v1954 = vpop.f32.mrb[0].mxu0
      %1955 = vmatprep.mubr.f32.mxu0 0.0
      %1956 = vmatmul.mubr.f32.gmra.mrb[0].mxu0 %v1830
      %v1957 = vpop.f32.mrb[0].mxu0
      %v1958 = vadd.f32 %v976, %v1957
      %v1959 = vpop.f32.mrb[0].mxu0
      %1960 = vmatprep.mubr.f32.mxu0 0.0
      %1961 = vmatmul.mubr.f32.gmra.mrb[0].mxu0 %v1833
      %v1962 = vpop.f32.mrb[0].mxu0
      %v1963 = vadd.f32 %v976, %v1962
      %v1964 = vpop.f32.mrb[0].mxu0
      %1965 = vmatprep.mubr.f32.mxu0 0.0
      %1966 = vmatmul.mubr.f32.gmra.mrb[0].mxu0 %v1836
      %v1967 = vpop.f32.mrb[0].mxu0
      %v1968 = vadd.f32 %v976, %v1967
      %v1969 = vpop.f32.mrb[0].mxu0
      %1970 = vmatprep.mubr.f32.mxu0 0.0
      %1971 = vmatmul.mubr.f32.gmra.mrb[0].mxu0 %v1839
      %v1972 = vpop.f32.mrb[0].mxu0
      %v1973 = vadd.f32 %v976, %v1972
      %v1974 = vpop.f32.mrb[0].mxu0
      %1975 = vmatprep.mubr.f32.mxu0 0.0
      %1976 = vmatmul.mubr.f32.gmra.mrb[0].mxu0 %v1842
      %v1977 = vpop.f32.mrb[0].mxu0
      %v1978 = vadd.f32 %v976, %v1977
      %v1979 = vpop.f32.mrb[0].mxu0
      %1980 = vmatprep.mubr.f32.mxu0 0.0
      %1981 = vmatmul.mubr.f32.gmra.mrb[0].mxu0 %v1845
      %v1982 = vpop.f32.mrb[0].mxu0
      %v1983 = vadd.f32 %v976, %v1982
      %v1984 = vpop.f32.mrb[0].mxu0
      %1985 = vmatprep.mubr.f32.mxu0 0.0
      %1986 = vmatmul.mubr.f32.gmra.mrb[0].mxu0 %v1848
      %v1987 = vpop.f32.mrb[0].mxu0
      %v1988 = vadd.f32 %v976, %v1987
      %v1989 = vpop.f32.mrb[0].mxu0
      %1990 = vmatprep.mubr.f32.mxu0 0.0
      %1991 = vmatmul.mubr.f32.gmra.mrb[0].mxu0 %v1851
      %v1992 = vpop.f32.mrb[0].mxu0
      %v1993 = vadd.f32 %v976, %v1992
      %v1994 = vpop.f32.mrb[0].mxu0
      %1995 = vmatprep.mubr.f32.mxu0 0.0
      %1996 = vmatmul.mubr.f32.gmra.mrb[0].mxu0 %v1854
      %v1997 = vpop.f32.mrb[0].mxu0
      %v1998 = vadd.f32 %v976, %v1997
      %v1999 = vpop.f32.mrb[0].mxu0
      %2000 = vdwg.mxu0
      %vm2001 = vcmp.ge.f32.partialorder %v1923, 0.0
      %vm2002 = vcmp.ge.f32.partialorder %v1928, 0.0
      %vm2003 = vcmp.ge.f32.partialorder %v1933, 0.0
      %vm2004 = vcmp.ge.f32.partialorder %v1938, 0.0
      %vm2005 = vcmp.ge.f32.partialorder %v1943, 0.0
      %vm2006 = vcmp.ge.f32.partialorder %v1948, 0.0
      %vm2007 = vcmp.ge.f32.partialorder %v1953, 0.0
      %vm2008 = vcmp.ge.f32.partialorder %v1958, 0.0
      %vm2009 = vcmp.ge.f32.partialorder %v1963, 0.0
      %vm2010 = vcmp.ge.f32.partialorder %v1968, 0.0
      %vm2011 = vcmp.ge.f32.partialorder %v1973, 0.0
      %vm2012 = vcmp.ge.f32.partialorder %v1978, 0.0
      %vm2013 = vcmp.ge.f32.partialorder %v1983, 0.0
      %vm2014 = vcmp.ge.f32.partialorder %v1988, 0.0
      %vm2015 = vcmp.ge.f32.partialorder %v1993, 0.0
      %vm2016 = vcmp.ge.f32.partialorder %v1998, 0.0
      %v2017 = vmul.f32 %v1923, 0.01
      %v2018 = vmul.f32 %v1928, 0.01
      %v2019 = vmul.f32 %v1933, 0.01
      %v2020 = vmul.f32 %v1938, 0.01
      %v2021 = vmul.f32 %v1943, 0.01
      %v2022 = vmul.f32 %v1948, 0.01
      %v2023 = vmul.f32 %v1953, 0.01
      %v2024 = vmul.f32 %v1958, 0.01
      %v2025 = vmul.f32 %v1963, 0.01
      %v2026 = vmul.f32 %v1968, 0.01
      %v2027 = vmul.f32 %v1973, 0.01
      %v2028 = vmul.f32 %v1978, 0.01
      %v2029 = vmul.f32 %v1983, 0.01
      %v2030 = vmul.f32 %v1988, 0.01
      %v2031 = vmul.f32 %v1993, 0.01
      %v2032 = vmul.f32 %v1998, 0.01
      %v2033 = vsel %vm2001, %v1923, %v2017
      %v2034 = vsel %vm2002, %v1928, %v2018
      %v2035 = vsel %vm2003, %v1933, %v2019
      %v2036 = vsel %vm2004, %v1938, %v2020
      %v2037 = vsel %vm2005, %v1943, %v2021
      %v2038 = vsel %vm2006, %v1948, %v2022
      %v2039 = vsel %vm2007, %v1953, %v2023
      %v2040 = vsel %vm2008, %v1958, %v2024
      %v2041 = vsel %vm2009, %v1963, %v2025
      %v2042 = vsel %vm2010, %v1968, %v2026
      %v2043 = vsel %vm2011, %v1973, %v2027
      %v2044 = vsel %vm2012, %v1978, %v2028
      %v2045 = vsel %vm2013, %v1983, %v2029
      %v2046 = vsel %vm2014, %v1988, %v2030
      %v2047 = vsel %vm2015, %v1993, %v2031
      %v2048 = vsel %vm2016, %v1998, %v2032
      %v2065 = vrot.slane %v2033, 7
      %v2066 = vrot.slane %v2034, 7
      %v2067 = vrot.slane %v2035, 7
      %v2068 = vrot.slane %v2036, 7
      %v2069 = vrot.slane %v2037, 7
      %v2070 = vrot.slane %v2038, 7
      %v2071 = vrot.slane %v2039, 7
      %v2072 = vrot.slane %v2040, 7
      %v2073 = vrot.slane %v2041, 7
      %v2074 = vrot.slane %v2042, 7
      %v2075 = vrot.slane %v2043, 7
      %v2076 = vrot.slane %v2044, 7
      %v2077 = vrot.slane %v2045, 7
      %v2078 = vrot.slane %v2046, 7
      %v2079 = vrot.slane %v2047, 7
      %v2080 = vrot.slane %v2048, 7
      %vm2097 = vcmask 1040384
      %v2098 = vsel %vm2097, 0.0, %v2065
      %v2099 = vsel %vm2097, 0.0, %v2066
      %v2100 = vsel %vm2097, 0.0, %v2067
      %v2101 = vsel %vm2097, 0.0, %v2068
      %v2102 = vsel %vm2097, 0.0, %v2069
      %v2103 = vsel %vm2097, 0.0, %v2070
      %v2104 = vsel %vm2097, 0.0, %v2071
      %v2105 = vsel %vm2097, 0.0, %v2072
      %v2106 = vsel %vm2097, 0.0, %v2073
      %v2107 = vsel %vm2097, 0.0, %v2074
      %v2108 = vsel %vm2097, 0.0, %v2075
      %v2109 = vsel %vm2097, 0.0, %v2076
      %v2110 = vsel %vm2097, 0.0, %v2077
      %v2111 = vsel %vm2097, 0.0, %v2078
      %v2112 = vsel %vm2097, 0.0, %v2079
      %v2113 = vsel %vm2097, 0.0, %v2080
      %2122 = vrot.lane.b32.xlu0 0.0, 8
      %v2123 = vpop.permute.xlu0 %2122
      %2124 = vrot.lane.b32.xlu0 %v1209, 8
      %v2125 = vpop.permute.xlu0 %2124
      %2126 = vrot.lane.b32.xlu0 %v1211, 8
      %v2127 = vpop.permute.xlu0 %2126
      %2128 = vrot.lane.b32.xlu0 %v1213, 8
      %v2129 = vpop.permute.xlu0 %2128
      %2130 = vrot.lane.b32.xlu0 %v1215, 8
      %v2131 = vpop.permute.xlu0 %2130
      %2132 = vrot.lane.b32.xlu0 %v1217, 8
      %v2133 = vpop.permute.xlu0 %2132
      %2134 = vrot.lane.b32.xlu0 %v1219, 8
      %v2135 = vpop.permute.xlu0 %2134
      %2136 = vrot.lane.b32.xlu0 %v1221, 8
      %v2137 = vpop.permute.xlu0 %2136
      %v2153 = vrot.slane 0.0, 1
      %v2154 = vsel %vm433, %v2153, %v2153
      %v2155 = vrot.slane %v2099, 1
      %v2156 = vrot.slane %v2066, 1
      %v2157 = vsel %vm433, %v2155, %v2156
      %v2158 = vrot.slane %v2101, 1
      %v2159 = vrot.slane %v2068, 1
      %v2160 = vsel %vm433, %v2158, %v2159
      %v2161 = vrot.slane %v2103, 1
      %v2162 = vrot.slane %v2070, 1
      %v2163 = vsel %vm433, %v2161, %v2162
      %v2164 = vrot.slane %v2105, 1
      %v2165 = vrot.slane %v2072, 1
      %v2166 = vsel %vm433, %v2164, %v2165
      %v2167 = vrot.slane %v2107, 1
      %v2168 = vrot.slane %v2074, 1
      %v2169 = vsel %vm433, %v2167, %v2168
      %v2170 = vrot.slane %v2109, 1
      %v2171 = vrot.slane %v2076, 1
      %v2172 = vsel %vm433, %v2170, %v2171
      %v2173 = vrot.slane %v2111, 1
      %v2174 = vrot.slane %v2078, 1
      %v2175 = vsel %vm433, %v2173, %v2174
      %2176 = vrot.lane.b32.xlu0 %v2154, 16
      %v2177 = vpop.permute.xlu0 %2176
      %2178 = vrot.lane.b32.xlu0 %v2157, 16
      %v2179 = vpop.permute.xlu0 %2178
      %2180 = vrot.lane.b32.xlu0 %v2160, 16
      %v2181 = vpop.permute.xlu0 %2180
      %2182 = vrot.lane.b32.xlu0 %v2163, 16
      %v2183 = vpop.permute.xlu0 %2182
      %2184 = vrot.lane.b32.xlu0 %v2166, 16
      %v2185 = vpop.permute.xlu0 %2184
      %2186 = vrot.lane.b32.xlu0 %v2169, 16
      %v2187 = vpop.permute.xlu0 %2186
      %2188 = vrot.lane.b32.xlu0 %v2172, 16
      %v2189 = vpop.permute.xlu0 %2188
      %2190 = vrot.lane.b32.xlu0 %v2175, 16
      %v2191 = vpop.permute.xlu0 %2190
      %v2200 = vrot.slane %v1209, 1
      %v2201 = vsel %vm433, %v2200, %v2153
      %v2202 = vrot.slane %v1211, 1
      %v2203 = vsel %vm433, %v2202, %v2153
      %v2204 = vrot.slane %v1213, 1
      %v2205 = vsel %vm433, %v2204, %v2153
      %v2206 = vrot.slane %v1215, 1
      %v2207 = vsel %vm433, %v2206, %v2153
      %v2208 = vrot.slane %v1217, 1
      %v2209 = vsel %vm433, %v2208, %v2153
      %v2210 = vrot.slane %v1219, 1
      %v2211 = vsel %vm433, %v2210, %v2153
      %v2212 = vrot.slane %v1221, 1
      %v2213 = vsel %vm433, %v2212, %v2153
      %2214 = vrot.lane.b32.xlu0 %v2154, 24
      %v2215 = vpop.permute.xlu0 %2214
      %2216 = vrot.lane.b32.xlu0 %v2201, 24
      %v2217 = vpop.permute.xlu0 %2216
      %2218 = vrot.lane.b32.xlu0 %v2203, 24
      %v2219 = vpop.permute.xlu0 %2218
      %2220 = vrot.lane.b32.xlu0 %v2205, 24
      %v2221 = vpop.permute.xlu0 %2220
      %2222 = vrot.lane.b32.xlu0 %v2207, 24
      %v2223 = vpop.permute.xlu0 %2222
      %2224 = vrot.lane.b32.xlu0 %v2209, 24
      %v2225 = vpop.permute.xlu0 %2224
      %2226 = vrot.lane.b32.xlu0 %v2211, 24
      %v2227 = vpop.permute.xlu0 %2226
      %2228 = vrot.lane.b32.xlu0 %v2213, 24
      %v2229 = vpop.permute.xlu0 %2228
      %2246 = vrot.lane.b32.xlu0 %v2098, 32
      %v2247 = vpop.permute.xlu0 %2246
      %2248 = vrot.lane.b32.xlu0 %v2100, 32
      %v2249 = vpop.permute.xlu0 %2248
      %2250 = vrot.lane.b32.xlu0 %v2102, 32
      %v2251 = vpop.permute.xlu0 %2250
      %2252 = vrot.lane.b32.xlu0 %v2104, 32
      %v2253 = vpop.permute.xlu0 %2252
      %2254 = vrot.lane.b32.xlu0 %v2106, 32
      %v2255 = vpop.permute.xlu0 %2254
      %2256 = vrot.lane.b32.xlu0 %v2108, 32
      %v2257 = vpop.permute.xlu0 %2256
      %2258 = vrot.lane.b32.xlu0 %v2110, 32
      %v2259 = vpop.permute.xlu0 %2258
      %2260 = vrot.lane.b32.xlu0 %v2112, 32
      %v2261 = vpop.permute.xlu0 %2260
      %2278 = vrot.lane.b32.xlu0 %v1208, 40
      %v2279 = vpop.permute.xlu0 %2278
      %2280 = vrot.lane.b32.xlu0 %v1210, 40
      %v2281 = vpop.permute.xlu0 %2280
      %2282 = vrot.lane.b32.xlu0 %v1212, 40
      %v2283 = vpop.permute.xlu0 %2282
      %2284 = vrot.lane.b32.xlu0 %v1214, 40
      %v2285 = vpop.permute.xlu0 %2284
      %2286 = vrot.lane.b32.xlu0 %v1216, 40
      %v2287 = vpop.permute.xlu0 %2286
      %2288 = vrot.lane.b32.xlu0 %v1218, 40
      %v2289 = vpop.permute.xlu0 %2288
      %2290 = vrot.lane.b32.xlu0 %v1220, 40
      %v2291 = vpop.permute.xlu0 %2290
      %2292 = vrot.lane.b32.xlu0 %v1222, 40
      %v2293 = vpop.permute.xlu0 %2292
      %v2302 = vrot.slane %v2098, 1
      %v2303 = vrot.slane %v2065, 1
      %v2304 = vsel %vm433, %v2302, %v2303
      %v2305 = vrot.slane %v2100, 1
      %v2306 = vrot.slane %v2067, 1
      %v2307 = vsel %vm433, %v2305, %v2306
      %v2308 = vrot.slane %v2102, 1
      %v2309 = vrot.slane %v2069, 1
      %v2310 = vsel %vm433, %v2308, %v2309
      %v2311 = vrot.slane %v2104, 1
      %v2312 = vrot.slane %v2071, 1
      %v2313 = vsel %vm433, %v2311, %v2312
      %v2314 = vrot.slane %v2106, 1
      %v2315 = vrot.slane %v2073, 1
      %v2316 = vsel %vm433, %v2314, %v2315
      %v2317 = vrot.slane %v2108, 1
      %v2318 = vrot.slane %v2075, 1
      %v2319 = vsel %vm433, %v2317, %v2318
      %v2320 = vrot.slane %v2110, 1
      %v2321 = vrot.slane %v2077, 1
      %v2322 = vsel %vm433, %v2320, %v2321
      %v2323 = vrot.slane %v2112, 1
      %v2324 = vrot.slane %v2079, 1
      %v2325 = vsel %vm433, %v2323, %v2324
      %2326 = vrot.lane.b32.xlu0 %v2304, 48
      %v2327 = vpop.permute.xlu0 %2326
      %2328 = vrot.lane.b32.xlu0 %v2307, 48
      %v2329 = vpop.permute.xlu0 %2328
      %2330 = vrot.lane.b32.xlu0 %v2310, 48
      %v2331 = vpop.permute.xlu0 %2330
      %2332 = vrot.lane.b32.xlu0 %v2313, 48
      %v2333 = vpop.permute.xlu0 %2332
      %2334 = vrot.lane.b32.xlu0 %v2316, 48
      %v2335 = vpop.permute.xlu0 %2334
      %2336 = vrot.lane.b32.xlu0 %v2319, 48
      %v2337 = vpop.permute.xlu0 %2336
      %2338 = vrot.lane.b32.xlu0 %v2322, 48
      %v2339 = vpop.permute.xlu0 %2338
      %2340 = vrot.lane.b32.xlu0 %v2325, 48
      %v2341 = vpop.permute.xlu0 %2340
      %v2350 = vrot.slane %v1208, 1
      %v2351 = vsel %vm433, %v2350, %v2153
      %v2352 = vrot.slane %v1210, 1
      %v2353 = vsel %vm433, %v2352, %v2153
      %v2354 = vrot.slane %v1212, 1
      %v2355 = vsel %vm433, %v2354, %v2153
      %v2356 = vrot.slane %v1214, 1
      %v2357 = vsel %vm433, %v2356, %v2153
      %v2358 = vrot.slane %v1216, 1
      %v2359 = vsel %vm433, %v2358, %v2153
      %v2360 = vrot.slane %v1218, 1
      %v2361 = vsel %vm433, %v2360, %v2153
      %v2362 = vrot.slane %v1220, 1
      %v2363 = vsel %vm433, %v2362, %v2153
      %v2364 = vrot.slane %v1222, 1
      %v2365 = vsel %vm433, %v2364, %v2153
      %2366 = vrot.lane.b32.xlu0 %v2351, 56
      %v2367 = vpop.permute.xlu0 %2366
      %2368 = vrot.lane.b32.xlu0 %v2353, 56
      %v2369 = vpop.permute.xlu0 %2368
      %2370 = vrot.lane.b32.xlu0 %v2355, 56
      %v2371 = vpop.permute.xlu0 %2370
      %2372 = vrot.lane.b32.xlu0 %v2357, 56
      %v2373 = vpop.permute.xlu0 %2372
      %2374 = vrot.lane.b32.xlu0 %v2359, 56
      %v2375 = vpop.permute.xlu0 %2374
      %2376 = vrot.lane.b32.xlu0 %v2361, 56
      %v2377 = vpop.permute.xlu0 %2376
      %2378 = vrot.lane.b32.xlu0 %v2363, 56
      %v2379 = vpop.permute.xlu0 %2378
      %2380 = vrot.lane.b32.xlu0 %v2365, 56
      %v2381 = vpop.permute.xlu0 %2380
      %2391 = vrot.lane.b32.xlu0 %v2099, 64
      %v2392 = vpop.permute.xlu0 %2391
      %2393 = vrot.lane.b32.xlu0 %v2101, 64
      %v2394 = vpop.permute.xlu0 %2393
      %2395 = vrot.lane.b32.xlu0 %v2103, 64
      %v2396 = vpop.permute.xlu0 %2395
      %2397 = vrot.lane.b32.xlu0 %v2105, 64
      %v2398 = vpop.permute.xlu0 %2397
      %2399 = vrot.lane.b32.xlu0 %v2107, 64
      %v2400 = vpop.permute.xlu0 %2399
      %2401 = vrot.lane.b32.xlu0 %v2109, 64
      %v2402 = vpop.permute.xlu0 %2401
      %2403 = vrot.lane.b32.xlu0 %v2111, 64
      %v2404 = vpop.permute.xlu0 %2403
      %2405 = vrot.lane.b32.xlu0 %v2113, 64
      %v2406 = vpop.permute.xlu0 %2405
      %2416 = vrot.lane.b32.xlu0 %v1209, 72
      %v2417 = vpop.permute.xlu0 %2416
      %2418 = vrot.lane.b32.xlu0 %v1211, 72
      %v2419 = vpop.permute.xlu0 %2418
      %2420 = vrot.lane.b32.xlu0 %v1213, 72
      %v2421 = vpop.permute.xlu0 %2420
      %2422 = vrot.lane.b32.xlu0 %v1215, 72
      %v2423 = vpop.permute.xlu0 %2422
      %2424 = vrot.lane.b32.xlu0 %v1217, 72
      %v2425 = vpop.permute.xlu0 %2424
      %2426 = vrot.lane.b32.xlu0 %v1219, 72
      %v2427 = vpop.permute.xlu0 %2426
      %2428 = vrot.lane.b32.xlu0 %v1221, 72
      %v2429 = vpop.permute.xlu0 %2428
      %2430 = vrot.lane.b32.xlu0 %v1223, 72
      %v2431 = vpop.permute.xlu0 %2430
      %v2440 = vrot.slane %v2113, 1
      %v2441 = vrot.slane %v2080, 1
      %v2442 = vsel %vm433, %v2440, %v2441
      %2443 = vrot.lane.b32.xlu0 %v2157, 80
      %v2444 = vpop.permute.xlu0 %2443
      %2445 = vrot.lane.b32.xlu0 %v2160, 80
      %v2446 = vpop.permute.xlu0 %2445
      %2447 = vrot.lane.b32.xlu0 %v2163, 80
      %v2448 = vpop.permute.xlu0 %2447
      %2449 = vrot.lane.b32.xlu0 %v2166, 80
      %v2450 = vpop.permute.xlu0 %2449
      %2451 = vrot.lane.b32.xlu0 %v2169, 80
      %v2452 = vpop.permute.xlu0 %2451
      %2453 = vrot.lane.b32.xlu0 %v2172, 80
      %v2454 = vpop.permute.xlu0 %2453
      %2455 = vrot.lane.b32.xlu0 %v2175, 80
      %v2456 = vpop.permute.xlu0 %2455
      %2457 = vrot.lane.b32.xlu0 %v2442, 80
      %v2458 = vpop.permute.xlu0 %2457
      %v2467 = vrot.slane %v1223, 1
      %v2468 = vsel %vm433, %v2467, %v2153
      %2469 = vrot.lane.b32.xlu0 %v2201, 88
      %v2470 = vpop.permute.xlu0 %2469
      %2471 = vrot.lane.b32.xlu0 %v2203, 88
      %v2472 = vpop.permute.xlu0 %2471
      %2473 = vrot.lane.b32.xlu0 %v2205, 88
      %v2474 = vpop.permute.xlu0 %2473
      %2475 = vrot.lane.b32.xlu0 %v2207, 88
      %v2476 = vpop.permute.xlu0 %2475
      %2477 = vrot.lane.b32.xlu0 %v2209, 88
      %v2478 = vpop.permute.xlu0 %2477
      %2479 = vrot.lane.b32.xlu0 %v2211, 88
      %v2480 = vpop.permute.xlu0 %2479
      %2481 = vrot.lane.b32.xlu0 %v2213, 88
      %v2482 = vpop.permute.xlu0 %2481
      %2483 = vrot.lane.b32.xlu0 %v2468, 88
      %v2484 = vpop.permute.xlu0 %2483
      %2493 = vrot.lane.b32.xlu0 %v2100, 96
      %v2494 = vpop.permute.xlu0 %2493
      %2495 = vrot.lane.b32.xlu0 %v2102, 96
      %v2496 = vpop.permute.xlu0 %2495
      %2497 = vrot.lane.b32.xlu0 %v2104, 96
      %v2498 = vpop.permute.xlu0 %2497
      %2499 = vrot.lane.b32.xlu0 %v2106, 96
      %v2500 = vpop.permute.xlu0 %2499
      %2501 = vrot.lane.b32.xlu0 %v2108, 96
      %v2502 = vpop.permute.xlu0 %2501
      %2503 = vrot.lane.b32.xlu0 %v2110, 96
      %v2504 = vpop.permute.xlu0 %2503
      %2505 = vrot.lane.b32.xlu0 %v2112, 96
      %v2506 = vpop.permute.xlu0 %2505
      %2507 = vrot.lane.b32.xlu0 0.0, 96
      %v2508 = vpop.permute.xlu0 %2507
      %2517 = vrot.lane.b32.xlu0 %v1210, 104
      %v2518 = vpop.permute.xlu0 %2517
      %2519 = vrot.lane.b32.xlu0 %v1212, 104
      %v2520 = vpop.permute.xlu0 %2519
      %2521 = vrot.lane.b32.xlu0 %v1214, 104
      %v2522 = vpop.permute.xlu0 %2521
      %2523 = vrot.lane.b32.xlu0 %v1216, 104
      %v2524 = vpop.permute.xlu0 %2523
      %2525 = vrot.lane.b32.xlu0 %v1218, 104
      %v2526 = vpop.permute.xlu0 %2525
      %2527 = vrot.lane.b32.xlu0 %v1220, 104
      %v2528 = vpop.permute.xlu0 %2527
      %2529 = vrot.lane.b32.xlu0 %v1222, 104
      %v2530 = vpop.permute.xlu0 %2529
      %2531 = vrot.lane.b32.xlu0 0.0, 104
      %v2532 = vpop.permute.xlu0 %2531
      %2541 = vrot.lane.b32.xlu0 %v2307, 112
      %v2542 = vpop.permute.xlu0 %2541
      %2543 = vrot.lane.b32.xlu0 %v2310, 112
      %v2544 = vpop.permute.xlu0 %2543
      %2545 = vrot.lane.b32.xlu0 %v2313, 112
      %v2546 = vpop.permute.xlu0 %2545
      %2547 = vrot.lane.b32.xlu0 %v2316, 112
      %v2548 = vpop.permute.xlu0 %2547
      %2549 = vrot.lane.b32.xlu0 %v2319, 112
      %v2550 = vpop.permute.xlu0 %2549
      %2551 = vrot.lane.b32.xlu0 %v2322, 112
      %v2552 = vpop.permute.xlu0 %2551
      %2553 = vrot.lane.b32.xlu0 %v2325, 112
      %v2554 = vpop.permute.xlu0 %2553
      %2555 = vrot.lane.b32.xlu0 %v2154, 112
      %v2556 = vpop.permute.xlu0 %2555
      %2565 = vrot.lane.b32.xlu0 %v2353, 120
      %v2566 = vpop.permute.xlu0 %2565
      %2567 = vrot.lane.b32.xlu0 %v2355, 120
      %v2568 = vpop.permute.xlu0 %2567
      %2569 = vrot.lane.b32.xlu0 %v2357, 120
      %v2570 = vpop.permute.xlu0 %2569
      %2571 = vrot.lane.b32.xlu0 %v2359, 120
      %v2572 = vpop.permute.xlu0 %2571
      %2573 = vrot.lane.b32.xlu0 %v2361, 120
      %v2574 = vpop.permute.xlu0 %2573
      %2575 = vrot.lane.b32.xlu0 %v2363, 120
      %v2576 = vpop.permute.xlu0 %2575
      %2577 = vrot.lane.b32.xlu0 %v2365, 120
      %v2578 = vpop.permute.xlu0 %2577
      %2579 = vrot.lane.b32.xlu0 %v2154, 120
      %v2580 = vpop.permute.xlu0 %2579
      %v2589 = vsel %vm847, 0.0, %v2123
      %v2590 = vsel %vm847, %v2099, %v2125
      %v2591 = vsel %vm847, %v2101, %v2127
      %v2592 = vsel %vm847, %v2103, %v2129
      %v2593 = vsel %vm847, %v2105, %v2131
      %v2594 = vsel %vm847, %v2107, %v2133
      %v2595 = vsel %vm847, %v2109, %v2135
      %v2596 = vsel %vm847, %v2111, %v2137
      %v2597 = vsel %vm881, %v2589, %v2177
      %v2598 = vsel %vm881, %v2590, %v2179
      %v2599 = vsel %vm881, %v2591, %v2181
      %v2600 = vsel %vm881, %v2592, %v2183
      %v2601 = vsel %vm881, %v2593, %v2185
      %v2602 = vsel %vm881, %v2594, %v2187
      %v2603 = vsel %vm881, %v2595, %v2189
      %v2604 = vsel %vm881, %v2596, %v2191
      %v2605 = vsel %vm915, %v2597, %v2215
      %v2606 = vsel %vm915, %v2598, %v2217
      %v2607 = vsel %vm915, %v2599, %v2219
      %v2608 = vsel %vm915, %v2600, %v2221
      %v2609 = vsel %vm915, %v2601, %v2223
      %v2610 = vsel %vm915, %v2602, %v2225
      %v2611 = vsel %vm915, %v2603, %v2227
      %v2612 = vsel %vm915, %v2604, %v2229
      %v2613 = vsel %vm949, %v2605, %v2247
      %v2614 = vsel %vm949, %v2606, %v2249
      %v2615 = vsel %vm949, %v2607, %v2251
      %v2616 = vsel %vm949, %v2608, %v2253
      %v2617 = vsel %vm949, %v2609, %v2255
      %v2618 = vsel %vm949, %v2610, %v2257
      %v2619 = vsel %vm949, %v2611, %v2259
      %v2620 = vsel %vm949, %v2612, %v2261
      %vm2621 = vcmask 326656
      %v2622 = vsel %vm2621, %v2613, %v2279
      %v2623 = vsel %vm2621, %v2614, %v2281
      %v2624 = vsel %vm2621, %v2615, %v2283
      %v2625 = vsel %vm2621, %v2616, %v2285
      %v2626 = vsel %vm2621, %v2617, %v2287
      %v2627 = vsel %vm2621, %v2618, %v2289
      %v2628 = vsel %vm2621, %v2619, %v2291
      %v2629 = vsel %vm2621, %v2620, %v2293
      %vm2630 = vcmask 392192
      %v2631 = vsel %vm2630, %v2622, %v2327
      %v2632 = vsel %vm2630, %v2623, %v2329
      %v2633 = vsel %vm2630, %v2624, %v2331
      %v2634 = vsel %vm2630, %v2625, %v2333
      %v2635 = vsel %vm2630, %v2626, %v2335
      %v2636 = vsel %vm2630, %v2627, %v2337
      %v2637 = vsel %vm2630, %v2628, %v2339
      %v2638 = vsel %vm2630, %v2629, %v2341
      %vm2639 = vcmask 457728
      %v2640 = vsel %vm2639, %v2631, %v2367
      %v2641 = vsel %vm2639, %v2632, %v2369
      %v2642 = vsel %vm2639, %v2633, %v2371
      %v2643 = vsel %vm2639, %v2634, %v2373
      %v2644 = vsel %vm2639, %v2635, %v2375
      %v2645 = vsel %vm2639, %v2636, %v2377
      %v2646 = vsel %vm2639, %v2637, %v2379
      %v2647 = vsel %vm2639, %v2638, %v2381
      %vm2648 = vcmask 523264
      %v2649 = vsel %vm2648, %v2640, %v2392
      %v2650 = vsel %vm2648, %v2641, %v2394
      %v2651 = vsel %vm2648, %v2642, %v2396
      %v2652 = vsel %vm2648, %v2643, %v2398
      %v2653 = vsel %vm2648, %v2644, %v2400
      %v2654 = vsel %vm2648, %v2645, %v2402
      %v2655 = vsel %vm2648, %v2646, %v2404
      %v2656 = vsel %vm2648, %v2647, %v2406
      %vm2657 = vcmask 588800
      %v2658 = vsel %vm2657, %v2649, %v2417
      %v2659 = vsel %vm2657, %v2650, %v2419
      %v2660 = vsel %vm2657, %v2651, %v2421
      %v2661 = vsel %vm2657, %v2652, %v2423
      %v2662 = vsel %vm2657, %v2653, %v2425
      %v2663 = vsel %vm2657, %v2654, %v2427
      %v2664 = vsel %vm2657, %v2655, %v2429
      %v2665 = vsel %vm2657, %v2656, %v2431
      %vm2666 = vcmask 654336
      %v2667 = vsel %vm2666, %v2658, %v2444
      %v2668 = vsel %vm2666, %v2659, %v2446
      %v2669 = vsel %vm2666, %v2660, %v2448
      %v2670 = vsel %vm2666, %v2661, %v2450
      %v2671 = vsel %vm2666, %v2662, %v2452
      %v2672 = vsel %vm2666, %v2663, %v2454
      %v2673 = vsel %vm2666, %v2664, %v2456
      %v2674 = vsel %vm2666, %v2665, %v2458
      %vm2675 = vcmask 719872
      %v2676 = vsel %vm2675, %v2667, %v2470
      %v2677 = vsel %vm2675, %v2668, %v2472
      %v2678 = vsel %vm2675, %v2669, %v2474
      %v2679 = vsel %vm2675, %v2670, %v2476
      %v2680 = vsel %vm2675, %v2671, %v2478
      %v2681 = vsel %vm2675, %v2672, %v2480
      %v2682 = vsel %vm2675, %v2673, %v2482
      %v2683 = vsel %vm2675, %v2674, %v2484
      %vm2684 = vcmask 785408
      %v2685 = vsel %vm2684, %v2676, %v2494
      %v2686 = vsel %vm2684, %v2677, %v2496
      %v2687 = vsel %vm2684, %v2678, %v2498
      %v2688 = vsel %vm2684, %v2679, %v2500
      %v2689 = vsel %vm2684, %v2680, %v2502
      %v2690 = vsel %vm2684, %v2681, %v2504
      %v2691 = vsel %vm2684, %v2682, %v2506
      %v2692 = vsel %vm2684, %v2683, %v2508
      %vm2693 = vcmask 850944
      %v2694 = vsel %vm2693, %v2685, %v2518
      %v2695 = vsel %vm2693, %v2686, %v2520
      %v2696 = vsel %vm2693, %v2687, %v2522
      %v2697 = vsel %vm2693, %v2688, %v2524
      %v2698 = vsel %vm2693, %v2689, %v2526
      %v2699 = vsel %vm2693, %v2690, %v2528
      %v2700 = vsel %vm2693, %v2691, %v2530
      %v2701 = vsel %vm2693, %v2692, %v2532
      %vm2702 = vcmask 916480
      %v2703 = vsel %vm2702, %v2694, %v2542
      %v2704 = vsel %vm2702, %v2695, %v2544
      %v2705 = vsel %vm2702, %v2696, %v2546
      %v2706 = vsel %vm2702, %v2697, %v2548
      %v2707 = vsel %vm2702, %v2698, %v2550
      %v2708 = vsel %vm2702, %v2699, %v2552
      %v2709 = vsel %vm2702, %v2700, %v2554
      %v2710 = vsel %vm2702, %v2701, %v2556
      %vm2711 = vcmask 982016
      %v2712 = vsel %vm2711, %v2703, %v2566
      %v2713 = vsel %vm2711, %v2704, %v2568
      %v2714 = vsel %vm2711, %v2705, %v2570
      %v2715 = vsel %vm2711, %v2706, %v2572
      %v2716 = vsel %vm2711, %v2707, %v2574
      %v2717 = vsel %vm2711, %v2708, %v2576
      %v2718 = vsel %vm2711, %v2709, %v2578
      %v2719 = vsel %vm2711, %v2710, %v2580
      %v2720 = vld [vmem:[%s3] sm:$0xff]
      %v2721 = vld [vmem:[%s3 + $0x8] sm:$0xff]
      %v2722 = vld [vmem:[%s3 + $0x10] sm:$0xff]
      %v2723 = vld [vmem:[%s3 + $0x18] sm:$0xff]
      %v2724 = vld [vmem:[%s3 + $0x20] sm:$0xff]
      %v2725 = vld [vmem:[%s3 + $0x28] sm:$0xff]
      %v2726 = vld [vmem:[%s3 + $0x30] sm:$0xff]
      %v2727 = vld [vmem:[%s3 + $0x38] sm:$0xff]
      %v2728 = vld [vmem:[%s3 + $0x40] sm:$0xff]
      %v2729 = vld [vmem:[%s3 + $0x48] sm:$0xff]
      %v2730 = vld [vmem:[%s3 + $0x50] sm:$0xff]
      %v2731 = vld [vmem:[%s3 + $0x58] sm:$0xff]
      %v2732 = vld [vmem:[%s3 + $0x60] sm:$0xff]
      %v2733 = vld [vmem:[%s3 + $0x68] sm:$0xff]
      %v2734 = vld [vmem:[%s3 + $0x70] sm:$0xff]
      %v2735 = vld [vmem:[%s3 + $0x78] sm:$0xff]
      %v2736 = vld [vmem:[%s4] sm:$0x1]
      %v2738 = vlaneseq
      %v2739 = vshrl.u32 %v2738, 7
      %v2740 = vsub.s32 0, %v2739
      %v2741 = vrot.slane %v2736, %v2740
      %2743 = vmatprep.subr.mxu0 0.0
      %2744 = vmatpush1.msra.mxu0 %v2720
      %2745 = vmatprep.subr.mxu0 0.0
      %2746 = vmatpush1.msra.mxu0 %v2721
      %2747 = vmatprep.subr.mxu0 0.0
      %2748 = vmatpush1.msra.mxu0 %v2722
      %2749 = vmatprep.subr.mxu0 0.0
      %2750 = vmatpush1.msra.mxu0 %v2723
      %2751 = vmatprep.subr.mxu0 0.0
      %2752 = vmatpush1.msra.mxu0 %v2724
      %2753 = vmatprep.subr.mxu0 0.0
      %2754 = vmatpush1.msra.mxu0 %v2725
      %2755 = vmatprep.subr.mxu0 0.0
      %2756 = vmatpush1.msra.mxu0 %v2726
      %2757 = vmatprep.subr.mxu0 0.0
      %2758 = vmatpush1.msra.mxu0 %v2727
      %2759 = vmatprep.subr.mxu0 0.0
      %2760 = vmatpush1.msra.mxu0 %v2728
      %2761 = vmatprep.subr.mxu0 0.0
      %2762 = vmatpush1.msra.mxu0 %v2729
      %2763 = vmatprep.subr.mxu0 0.0
      %2764 = vmatpush1.msra.mxu0 %v2730
      %2765 = vmatprep.subr.mxu0 0.0
      %2766 = vmatpush1.msra.mxu0 %v2731
      %2767 = vmatprep.subr.mxu0 0.0
      %2768 = vmatpush1.msra.mxu0 %v2732
      %2769 = vmatprep.subr.mxu0 0.0
      %2770 = vmatpush1.msra.mxu0 %v2733
      %2771 = vmatprep.subr.mxu0 0.0
      %2772 = vmatpush1.msra.mxu0 %v2734
      %2773 = vmatprep.subr.mxu0 0.0
      %2774 = vmatpush1.msra.mxu0 %v2735
      %2775 = vmatprep.subr.mxu0 0.0
      %2776 = vmatpush1.msra.mxu0 0.0
      %2777 = vmatprep.subr.mxu0 0.0
      %2778 = vmatpush1.msra.mxu0 0.0
      %2779 = vmatprep.subr.mxu0 0.0
      %2780 = vmatpush1.msra.mxu0 0.0
      %2781 = vmatprep.subr.mxu0 0.0
      %2782 = vmatpush1.msra.mxu0 0.0
      %2783 = vmatprep.subr.mxu0 0.0
      %2784 = vmatpush1.msra.mxu0 0.0
      %2785 = vmatprep.subr.mxu0 0.0
      %2786 = vmatpush1.msra.mxu0 0.0
      %2787 = vmatprep.subr.mxu0 0.0
      %2788 = vmatpush1.msra.mxu0 0.0
      %2789 = vmatprep.subr.mxu0 0.0
      %2790 = vmatpush1.msra.mxu0 0.0
      %2791 = vmatprep.subr.mxu0 0.0
      %2792 = vmatpush1.msra.mxu0 0.0
      %2793 = vmatprep.subr.mxu0 0.0
      %2794 = vmatpush1.msra.mxu0 0.0
      %2795 = vmatprep.subr.mxu0 0.0
      %2796 = vmatpush1.msra.mxu0 0.0
      %2797 = vmatprep.subr.mxu0 0.0
      %2798 = vmatpush1.msra.mxu0 0.0
      %2799 = vmatprep.subr.mxu0 0.0
      %2800 = vmatpush1.msra.mxu0 0.0
      %2801 = vmatprep.subr.mxu0 0.0
      %2802 = vmatpush1.msra.mxu0 0.0
      %2803 = vmatprep.subr.mxu0 0.0
      %2804 = vmatpush1.msra.mxu0 0.0
      %2805 = vmatprep.subr.mxu0 0.0
      %2806 = vmatpush1.msra.mxu0 0.0
      %2807 = vmatprep.mubr.f32.mxu0 0.0
      %2808 = vmatmul.mubr.f32.gmra.mrb[0].mxu0 %v2712
      %v2809 = vpop.f32.mrb[0].mxu0
      %v2810 = vadd.f32 %v2741, %v2809
      %v2811 = vpop.f32.mrb[0].mxu0
      %2812 = vmatprep.mubr.f32.mxu0 0.0
      %2813 = vmatmul.mubr.f32.gmra.mrb[0].mxu0 %v2713
      %v2814 = vpop.f32.mrb[0].mxu0
      %v2815 = vadd.f32 %v2741, %v2814
      %v2816 = vpop.f32.mrb[0].mxu0
      %2817 = vmatprep.mubr.f32.mxu0 0.0
      %2818 = vmatmul.mubr.f32.gmra.mrb[0].mxu0 %v2714
      %v2819 = vpop.f32.mrb[0].mxu0
      %v2820 = vadd.f32 %v2741, %v2819
      %v2821 = vpop.f32.mrb[0].mxu0
      %2822 = vmatprep.mubr.f32.mxu0 0.0
      %2823 = vmatmul.mubr.f32.gmra.mrb[0].mxu0 %v2715
      %v2824 = vpop.f32.mrb[0].mxu0
      %v2825 = vadd.f32 %v2741, %v2824
      %v2826 = vpop.f32.mrb[0].mxu0
      %2827 = vmatprep.mubr.f32.mxu0 0.0
      %2828 = vmatmul.mubr.f32.gmra.mrb[0].mxu0 %v2716
      %v2829 = vpop.f32.mrb[0].mxu0
      %v2830 = vadd.f32 %v2741, %v2829
      %v2831 = vpop.f32.mrb[0].mxu0
      %2832 = vmatprep.mubr.f32.mxu0 0.0
      %2833 = vmatmul.mubr.f32.gmra.mrb[0].mxu0 %v2717
      %v2834 = vpop.f32.mrb[0].mxu0
      %v2835 = vadd.f32 %v2741, %v2834
      %v2836 = vpop.f32.mrb[0].mxu0
      %2837 = vmatprep.mubr.f32.mxu0 0.0
      %2838 = vmatmul.mubr.f32.gmra.mrb[0].mxu0 %v2718
      %v2839 = vpop.f32.mrb[0].mxu0
      %v2840 = vadd.f32 %v2741, %v2839
      %v2841 = vpop.f32.mrb[0].mxu0
      %2842 = vmatprep.mubr.f32.mxu0 0.0
      %2843 = vmatmul.mubr.f32.gmra.mrb[0].mxu0 %v2719
      %v2844 = vpop.f32.mrb[0].mxu0
      %v2845 = vadd.f32 %v2741, %v2844
      %v2846 = vpop.f32.mrb[0].mxu0
      %2847 = vdwg.mxu0
      %vm2848 = vcmp.ge.f32.partialorder %v2810, 0.0
      %vm2849 = vcmp.ge.f32.partialorder %v2815, 0.0
      %vm2850 = vcmp.ge.f32.partialorder %v2820, 0.0
      %vm2851 = vcmp.ge.f32.partialorder %v2825, 0.0
      %vm2852 = vcmp.ge.f32.partialorder %v2830, 0.0
      %vm2853 = vcmp.ge.f32.partialorder %v2835, 0.0
      %vm2854 = vcmp.ge.f32.partialorder %v2840, 0.0
      %vm2855 = vcmp.ge.f32.partialorder %v2845, 0.0
      %v2856 = vmul.f32 %v2810, 0.01
      %v2857 = vmul.f32 %v2815, 0.01
      %v2858 = vmul.f32 %v2820, 0.01
      %v2859 = vmul.f32 %v2825, 0.01
      %v2860 = vmul.f32 %v2830, 0.01
      %v2861 = vmul.f32 %v2835, 0.01
      %v2862 = vmul.f32 %v2840, 0.01
      %v2863 = vmul.f32 %v2845, 0.01
      %v2864 = vsel %vm2848, %v2810, %v2856
      %v2865 = vsel %vm2849, %v2815, %v2857
      %v2866 = vsel %vm2850, %v2820, %v2858
      %v2867 = vsel %vm2851, %v2825, %v2859
      %v2868 = vsel %vm2852, %v2830, %v2860
      %v2869 = vsel %vm2853, %v2835, %v2861
      %v2870 = vsel %vm2854, %v2840, %v2862
      %v2871 = vsel %vm2855, %v2845, %v2863
      %s2872 = smul.u32 %s18, 64
      %s2873 = scalar_lea.vmem %s7, %s2872
      %2874 = vst.msk [vmem:[%s2873] sm:$0xff] %vm847, %v2864
      %2875 = vst.msk [vmem:[%s2873 + $0x8] sm:$0xff] %vm847, %v2865
      %2876 = vst.msk [vmem:[%s2873 + $0x10] sm:$0xff] %vm847, %v2866
      %2877 = vst.msk [vmem:[%s2873 + $0x18] sm:$0xff] %vm847, %v2867
      %2878 = vst.msk [vmem:[%s2873 + $0x20] sm:$0xff] %vm847, %v2868
      %2879 = vst.msk [vmem:[%s2873 + $0x28] sm:$0xff] %vm847, %v2869
      %2880 = vst.msk [vmem:[%s2873 + $0x30] sm:$0xff] %vm847, %v2870
      %2881 = vst.msk [vmem:[%s2873 + $0x38] sm:$0xff] %vm847, %v2871
      %p2882 = scmp.eq.s32.totalorder %s18, 1
      // Predicated region
      $region49: #{tpu_custom_call.1} parent=47 // pred_check
        %p2883 = pneg %p2882
      $region50: #{tpu_custom_call.1} parent=47 // pred_check_branch
        %2885 = sbr.rel (%p2883) target = $region52
      $region51: #{tpu_custom_call.1} parent=47 // pred_region
        %v2886 = vld [vmem:[%s7] sm:$0xff]
        %v2887 = vld [vmem:[%s7 + $0x8] sm:$0xff]
        %v2888 = vld [vmem:[%s7 + $0x10] sm:$0xff]
        %v2889 = vld [vmem:[%s7 + $0x18] sm:$0xff]
        %v2890 = vld [vmem:[%s7 + $0x20] sm:$0xff]
        %v2891 = vld [vmem:[%s7 + $0x28] sm:$0xff]
        %v2892 = vld [vmem:[%s7 + $0x30] sm:$0xff]
        %v2893 = vld [vmem:[%s7 + $0x38] sm:$0xff]
        %v2894 = vld [vmem:[%s7 + $0x40] sm:$0xff]
        %v2895 = vld [vmem:[%s7 + $0x48] sm:$0xff]
        %v2896 = vld [vmem:[%s7 + $0x50] sm:$0xff]
        %v2897 = vld [vmem:[%s7 + $0x58] sm:$0xff]
        %v2898 = vld [vmem:[%s7 + $0x60] sm:$0xff]
        %v2899 = vld [vmem:[%s7 + $0x68] sm:$0xff]
        %v2900 = vld [vmem:[%s7 + $0x70] sm:$0xff]
        %v2901 = vld [vmem:[%s7 + $0x78] sm:$0xff]
        %v2902 = vsel %vm847, %v2886, 0.0
        %v2903 = vsel %vm847, %v2894, 0.0
        %v2904 = vadd.f32 %v2902, %v2903
        %v2905 = vsel %vm847, %v2887, 0.0
        %v2906 = vsel %vm847, %v2895, 0.0
        %v2907 = vadd.f32 %v2905, %v2906
        %v2908 = vsel %vm847, %v2888, 0.0
        %v2909 = vsel %vm847, %v2896, 0.0
        %v2910 = vadd.f32 %v2908, %v2909
        %v2911 = vsel %vm847, %v2889, 0.0
        %v2912 = vsel %vm847, %v2897, 0.0
        %v2913 = vadd.f32 %v2911, %v2912
        %v2914 = vsel %vm847, %v2890, 0.0
        %v2915 = vsel %vm847, %v2898, 0.0
        %v2916 = vadd.f32 %v2914, %v2915
        %v2917 = vsel %vm847, %v2891, 0.0
        %v2918 = vsel %vm847, %v2899, 0.0
        %v2919 = vadd.f32 %v2917, %v2918
        %v2920 = vsel %vm847, %v2892, 0.0
        %v2921 = vsel %vm847, %v2900, 0.0
        %v2922 = vadd.f32 %v2920, %v2921
        %v2923 = vsel %vm847, %v2893, 0.0
        %v2924 = vsel %vm847, %v2901, 0.0
        %v2925 = vadd.f32 %v2923, %v2924
        %v2926 = vsel %vm847, %v2904, 0.0
        %v2927 = vsel %vm847, %v2907, 0.0
        %v2928 = vadd.f32 %v2926, %v2927
        %v2929 = vsel %vm847, %v2910, 0.0
        %v2930 = vadd.f32 %v2928, %v2929
        %v2931 = vsel %vm847, %v2913, 0.0
        %v2932 = vadd.f32 %v2930, %v2931
        %v2933 = vsel %vm847, %v2916, 0.0
        %v2934 = vadd.f32 %v2932, %v2933
        %v2935 = vsel %vm847, %v2919, 0.0
        %v2936 = vadd.f32 %v2934, %v2935
        %v2937 = vsel %vm847, %v2922, 0.0
        %v2938 = vadd.f32 %v2936, %v2937
        %v2939 = vsel %vm847, %v2925, 0.0
        %v2940 = vadd.f32 %v2938, %v2939
        %v2941 = vrot.slane %v2940, 4
        %v2942 = vadd.f32 %v2940, %v2941
        %v2943 = vrot.slane %v2942, 2
        %v2944 = vadd.f32 %v2942, %v2943
        %v2945 = vrot.slane %v2944, 1
        %v2946 = vadd.f32 %v2944, %v2945
        %v2947 = vrcp.pop 128.0
        %v2948 = vmul.f32 %v2946, %v2947
        %v2949 = vsub.f32 %v2886, %v2948
        %v2950 = vsub.f32 %v2887, %v2948
        %v2951 = vsub.f32 %v2888, %v2948
        %v2952 = vsub.f32 %v2889, %v2948
        %v2953 = vsub.f32 %v2890, %v2948
        %v2954 = vsub.f32 %v2891, %v2948
        %v2955 = vsub.f32 %v2892, %v2948
        %v2956 = vsub.f32 %v2893, %v2948
        %v2957 = vsub.f32 %v2894, %v2948
        %v2958 = vsub.f32 %v2895, %v2948
        %v2959 = vsub.f32 %v2896, %v2948
        %v2960 = vsub.f32 %v2897, %v2948
        %v2961 = vsub.f32 %v2898, %v2948
        %v2962 = vsub.f32 %v2899, %v2948
        %v2963 = vsub.f32 %v2900, %v2948
        %v2964 = vsub.f32 %v2901, %v2948
        %v2965 = vmul.f32 %v2949, %v2949
        %v2966 = vmul.f32 %v2950, %v2950
        %v2967 = vmul.f32 %v2951, %v2951
        %v2968 = vmul.f32 %v2952, %v2952
        %v2969 = vmul.f32 %v2953, %v2953
        %v2970 = vmul.f32 %v2954, %v2954
        %v2971 = vmul.f32 %v2955, %v2955
        %v2972 = vmul.f32 %v2956, %v2956
        %v2973 = vmul.f32 %v2957, %v2957
        %v2974 = vmul.f32 %v2958, %v2958
        %v2975 = vmul.f32 %v2959, %v2959
        %v2976 = vmul.f32 %v2960, %v2960
        %v2977 = vmul.f32 %v2961, %v2961
        %v2978 = vmul.f32 %v2962, %v2962
        %v2979 = vmul.f32 %v2963, %v2963
        %v2980 = vmul.f32 %v2964, %v2964
        %v2981 = vsel %vm847, %v2965, 0.0
        %v2982 = vsel %vm847, %v2973, 0.0
        %v2983 = vadd.f32 %v2981, %v2982
        %v2984 = vsel %vm847, %v2966, 0.0
        %v2985 = vsel %vm847, %v2974, 0.0
        %v2986 = vadd.f32 %v2984, %v2985
        %v2987 = vsel %vm847, %v2967, 0.0
        %v2988 = vsel %vm847, %v2975, 0.0
        %v2989 = vadd.f32 %v2987, %v2988
        %v2990 = vsel %vm847, %v2968, 0.0
        %v2991 = vsel %vm847, %v2976, 0.0
        %v2992 = vadd.f32 %v2990, %v2991
        %v2993 = vsel %vm847, %v2969, 0.0
        %v2994 = vsel %vm847, %v2977, 0.0
        %v2995 = vadd.f32 %v2993, %v2994
        %v2996 = vsel %vm847, %v2970, 0.0
        %v2997 = vsel %vm847, %v2978, 0.0
        %v2998 = vadd.f32 %v2996, %v2997
        %v2999 = vsel %vm847, %v2971, 0.0
        %v3000 = vsel %vm847, %v2979, 0.0
        %v3001 = vadd.f32 %v2999, %v3000
        %v3002 = vsel %vm847, %v2972, 0.0
        %v3003 = vsel %vm847, %v2980, 0.0
        %v3004 = vadd.f32 %v3002, %v3003
        %v3005 = vsel %vm847, %v2983, 0.0
        %v3006 = vsel %vm847, %v2986, 0.0
        %v3007 = vadd.f32 %v3005, %v3006
        %v3008 = vsel %vm847, %v2989, 0.0
        %v3009 = vadd.f32 %v3007, %v3008
        %v3010 = vsel %vm847, %v2992, 0.0
        %v3011 = vadd.f32 %v3009, %v3010
        %v3012 = vsel %vm847, %v2995, 0.0
        %v3013 = vadd.f32 %v3011, %v3012
        %v3014 = vsel %vm847, %v2998, 0.0
        %v3015 = vadd.f32 %v3013, %v3014
        %v3016 = vsel %vm847, %v3001, 0.0
        %v3017 = vadd.f32 %v3015, %v3016
        %v3018 = vsel %vm847, %v3004, 0.0
        %v3019 = vadd.f32 %v3017, %v3018
        %v3020 = vrot.slane %v3019, 4
        %v3021 = vadd.f32 %v3019, %v3020
        %v3022 = vrot.slane %v3021, 2
        %v3023 = vadd.f32 %v3021, %v3022
        %v3024 = vrot.slane %v3023, 1
        %v3025 = vadd.f32 %v3023, %v3024
        %v3026 = vmul.f32 %v3025, %v2947
        %v3027 = vadd.f32 %v3026, 1e-05
        %v3028 = vrsqrt.pop %v3027
        %v3029 = vmul.f32 %v2949, %v3028
        %v3030 = vmul.f32 %v2950, %v3028
        %v3031 = vmul.f32 %v2951, %v3028
        %v3032 = vmul.f32 %v2952, %v3028
        %v3033 = vmul.f32 %v2953, %v3028
        %v3034 = vmul.f32 %v2954, %v3028
        %v3035 = vmul.f32 %v2955, %v3028
        %v3036 = vmul.f32 %v2956, %v3028
        %v3037 = vmul.f32 %v2957, %v3028
        %v3038 = vmul.f32 %v2958, %v3028
        %v3039 = vmul.f32 %v2959, %v3028
        %v3040 = vmul.f32 %v2960, %v3028
        %v3041 = vmul.f32 %v2961, %v3028
        %v3042 = vmul.f32 %v2962, %v3028
        %v3043 = vmul.f32 %v2963, %v3028
        %v3044 = vmul.f32 %v2964, %v3028
        %v3045 = vld [vmem:[%s5] sm:$0x1]
        %v3047 = vlaneseq
        %v3048 = vshrl.u32 %v3047, 7
        %v3049 = vsub.s32 0, %v3048
        %v3050 = vrot.slane %v3045, %v3049
        %v3052 = vmul.f32 %v3029, %v3050
        %v3053 = vmul.f32 %v3030, %v3050
        %v3054 = vmul.f32 %v3031, %v3050
        %v3055 = vmul.f32 %v3032, %v3050
        %v3056 = vmul.f32 %v3033, %v3050
        %v3057 = vmul.f32 %v3034, %v3050
        %v3058 = vmul.f32 %v3035, %v3050
        %v3059 = vmul.f32 %v3036, %v3050
        %v3060 = vmul.f32 %v3037, %v3050
        %v3061 = vmul.f32 %v3038, %v3050
        %v3062 = vmul.f32 %v3039, %v3050
        %v3063 = vmul.f32 %v3040, %v3050
        %v3064 = vmul.f32 %v3041, %v3050
        %v3065 = vmul.f32 %v3042, %v3050
        %v3066 = vmul.f32 %v3043, %v3050
        %v3067 = vmul.f32 %v3044, %v3050
        %v3068 = vld [vmem:[%s6] sm:$0x1]
        %v3070 = vlaneseq
        %v3071 = vshrl.u32 %v3070, 7
        %v3072 = vsub.s32 0, %v3071
        %v3073 = vrot.slane %v3068, %v3072
        %v3075 = vadd.f32 %v3052, %v3073
        %v3076 = vadd.f32 %v3053, %v3073
        %v3077 = vadd.f32 %v3054, %v3073
        %v3078 = vadd.f32 %v3055, %v3073
        %v3079 = vadd.f32 %v3056, %v3073
        %v3080 = vadd.f32 %v3057, %v3073
        %v3081 = vadd.f32 %v3058, %v3073
        %v3082 = vadd.f32 %v3059, %v3073
        %v3083 = vadd.f32 %v3060, %v3073
        %v3084 = vadd.f32 %v3061, %v3073
        %v3085 = vadd.f32 %v3062, %v3073
        %v3086 = vadd.f32 %v3063, %v3073
        %v3087 = vadd.f32 %v3064, %v3073
        %v3088 = vadd.f32 %v3065, %v3073
        %v3089 = vadd.f32 %v3066, %v3073
        %v3090 = vadd.f32 %v3067, %v3073
        %3091 = vst.msk [vmem:[%s7] sm:$0xff] %vm847, %v3075
        %3092 = vst.msk [vmem:[%s7 + $0x8] sm:$0xff] %vm847, %v3076
        %3093 = vst.msk [vmem:[%s7 + $0x10] sm:$0xff] %vm847, %v3077
        %3094 = vst.msk [vmem:[%s7 + $0x18] sm:$0xff] %vm847, %v3078
        %3095 = vst.msk [vmem:[%s7 + $0x20] sm:$0xff] %vm847, %v3079
        %3096 = vst.msk [vmem:[%s7 + $0x28] sm:$0xff] %vm847, %v3080
        %3097 = vst.msk [vmem:[%s7 + $0x30] sm:$0xff] %vm847, %v3081
        %3098 = vst.msk [vmem:[%s7 + $0x38] sm:$0xff] %vm847, %v3082
        %3099 = vst.msk [vmem:[%s7 + $0x40] sm:$0xff] %vm847, %v3083
        %3100 = vst.msk [vmem:[%s7 + $0x48] sm:$0xff] %vm847, %v3084
        %3101 = vst.msk [vmem:[%s7 + $0x50] sm:$0xff] %vm847, %v3085
        %3102 = vst.msk [vmem:[%s7 + $0x58] sm:$0xff] %vm847, %v3086
        %3103 = vst.msk [vmem:[%s7 + $0x60] sm:$0xff] %vm847, %v3087
        %3104 = vst.msk [vmem:[%s7 + $0x68] sm:$0xff] %vm847, %v3088
        %3105 = vst.msk [vmem:[%s7 + $0x70] sm:$0xff] %vm847, %v3089
        %3106 = vst.msk [vmem:[%s7 + $0x78] sm:$0xff] %vm847, %v3090
      $region52: #{tpu_custom_call.1} parent=47 // pred_fallthru
        _
      // Predicated region
      $region53: #{tpu_custom_call.1} parent=47 // pred_check
        %p3107 = pneg %p183
      $region54: #{tpu_custom_call.1} parent=47 // pred_check_branch
        %3109 = sbr.rel (%p3107) target = $region56
      $region55: #{tpu_custom_call.1} parent=47 // pred_region
        _
      $region56: #{tpu_custom_call.1} parent=47 // pred_fallthru
        _
      // Predicated region
      $region57: #{tpu_custom_call.1} parent=47 // pred_check
        %p3110 = pneg %p183
      $region58: #{tpu_custom_call.1} parent=47 // pred_check_branch
        %3112 = sbr.rel (%p3110) target = $region60
      $region59: #{tpu_custom_call.1} parent=47 // pred_region
        _
      $region60: #{tpu_custom_call.1} parent=47 // pred_fallthru
        _
    $region48: #{tpu_custom_call.1} parent=5 // pred_fallthru
      _
    %p3113 = scmp.le.s32.totalorder 2, %s13
    // Predicated region
    $region61: #{tpu_custom_call.1} parent=5 // pred_check
      %p3114 = pneg %p3113
    $region62: #{tpu_custom_call.1} parent=5 // pred_check_branch
      %3116 = sbr.rel (%p3114) target = $region64
    $region63: #{tpu_custom_call.1} parent=5 // pred_region
      %s3117 = ssub.s32 %s13, 2
    $region64: #{tpu_custom_call.1} parent=5 // pred_fallthru
      _
  $region6: #{tpu_custom_call.1} parent=0 // loop_footer
    %s17 = sadd.s32 1, %s13
  $region7: #{tpu_custom_call.1} parent=0 // loop_footer_branch
    %12 = sbr.rel target = $region3
  $region8: #{tpu_custom_call.1} parent=0 // loop_exit
    _

</llo_original>
